<compile_context>
chip_gen: v7x
topology: tpu7x:2x2x1
jax: 0.10.0
libtpu: 0.0.40
codegen_flags: <defaults>
</compile_context>

<pallas_src>
import jax
import jax.numpy as jnp
from jax.experimental import pallas as pl
from jax.experimental.pallas import tpu as pltpu


def lstm_kernel(emb_ref, wih_ref, whh_ref, bias_ref, out_ref, h_sc, c_sc):
    """One grid step == one block of Tt time steps.

    emb_ref  : (B, Tt, E)   embeddings for this time block
    wih_ref  : (E, 4H)      input->gates weight (transposed vs. PyTorch), constant index
    whh_ref  : (H, 4H)      hidden->gates weight (transposed vs. PyTorch), constant index
    bias_ref : (1, 4H)      b_ih + b_hh
    out_ref  : (B, Tt, H)   output h_t slab for this time block
    h_sc/c_sc: (B, H) f32   VMEM scratch, hidden/cell state carried across grid steps
    """
    tb = pl.program_id(0)

    @pl.when(tb == 0)
    def _():
        h_sc[...] = jnp.zeros_like(h_sc)
        c_sc[...] = jnp.zeros_like(c_sc)

    B, Tt, E = emb_ref.shape
    H = h_sc.shape[1]

    wih = wih_ref[...]
    whh = whh_ref[...]
    bias = bias_ref[...]                               # (1, 4H)

    # ---- Hoisted input projection: ONE matmul for the whole time block. ----
    # The (B, Tt, E) -> (B*Tt, E) merge is layout-free when Tt % 8 == 0 (sublane tile).
    block_project = (Tt % 8 == 0)
    if block_project:
        x = emb_ref[...].reshape(B * Tt, E)
        pre = jnp.dot(x, wih, preferred_element_type=jnp.float32) + bias
        pre = pre.reshape(B, Tt, 4 * H)                # (B, Tt, 4H), includes bias

    h = h_sc[...]
    c = c_sc[...]
    # Static (fully unrolled) loop over the time block: all slice indices are
    # compile-time constants, so there is no dynamic sublane slicing in the hot loop.
    for t in range(Tt):
        if block_project:
            pre_t = pre[:, t, :]                       # (B, 4H)
        else:
            # Fallback for ragged/short time blocks: per-step projection.
            pre_t = jnp.dot(emb_ref[:, t, :], wih,
                            preferred_element_type=jnp.float32) + bias
        # Only the recurrent matmul stays inside the sequential loop.  h is cast to the
        # weight dtype so bf16 weights (recommended at production sizes) work; state and
        # accumulation stay f32.
        gates = pre_t + jnp.dot(
            h.astype(whh.dtype), whh, preferred_element_type=jnp.float32
        )                                              # (B, 4H), gate order i,f,g,o
        i_g = jax.nn.sigmoid(gates[:, 0 * H:1 * H])
        f_g = jax.nn.sigmoid(gates[:, 1 * H:2 * H])
        g_g = jnp.tanh(gates[:, 2 * H:3 * H])
        o_g = jax.nn.sigmoid(gates[:, 3 * H:4 * H])
        c = f_g * c + i_g * g_g
        h = o_g * jnp.tanh(c)
        # Accumulate into the output VMEM block; the (B, Tt, H) slab is written back to
        # HBM once per grid step.
        out_ref[:, t, :] = h.astype(out_ref.dtype)

    h_sc[...] = h
    c_sc[...] = c


def lstm_pallas(emb_btE, w_ih, w_hh, bias, *, time_block=8):
    """emb_btE: (B, T, E) float32. w_ih: (E,4H), w_hh: (H,4H), bias: (1,4H).

    Returns (B, T, H) float32, matching PyTorch nn.LSTM(batch_first=True) output.
    """
    B, T, E = emb_btE.shape
    H = w_hh.shape[0]

    Tt = min(time_block, T)
    assert T % Tt == 0, "sequence length must be a multiple of the time block"
    # NOTE: for production sizes keep H a multiple of 128 and B a multiple of 8 so the
    # gate slices and output stores are lane/sublane dense; cast w_ih/w_hh (and emb) to
    # bf16 on v6e/v7x for ~2x MXU throughput, keeping f32 state/accumulation.
    out = pl.pallas_call(
        lstm_kernel,
        out_shape=jax.ShapeDtypeStruct((B, T, H), jnp.float32),
        grid_spec=pltpu.PrefetchScalarGridSpec(
            num_scalar_prefetch=0,
            grid=(T // Tt,),
            in_specs=[
                # batch-first layout expressed directly via index_map (no transposes)
                pl.BlockSpec((B, Tt, E), lambda tb: (0, tb, 0)),
                pl.BlockSpec((E, 4 * H), lambda tb: (0, 0)),   # constant-index weights
                pl.BlockSpec((H, 4 * H), lambda tb: (0, 0)),
                pl.BlockSpec((1, 4 * H), lambda tb: (0, 0)),
            ],
            out_specs=pl.BlockSpec((B, Tt, H), lambda tb: (0, tb, 0)),
            scratch_shapes=[
                pltpu.VMEM((B, H), jnp.float32),   # h state
                pltpu.VMEM((B, H), jnp.float32),   # c state
            ],
        ),
        compiler_params=pltpu.CompilerParams(
            # Time recurrence is strictly sequential; never mark this axis parallel.
            # (A second-TC batch split only pays off for large B; skipped at B=2.)
            dimension_semantics=("arbitrary",),
            vmem_limit_bytes=32 * 1024 * 1024,
        ),
    )(emb_btE, w_ih, w_hh, bias)

    return out


def lstm_reference(emb_btE, w_ih, w_hh, bias):
    """Pure-JAX reference (lax.scan) matching PyTorch nn.LSTM semantics."""
    B, T, E = emb_btE.shape
    H = w_hh.shape[0]
    x_tbe = jnp.transpose(emb_btE, (1, 0, 2))

    def step(carry, x_t):
        h, c = carry
        gates = x_t @ w_ih + h @ w_hh + bias[0]
        i_g = jax.nn.sigmoid(gates[:, 0 * H:1 * H])
        f_g = jax.nn.sigmoid(gates[:, 1 * H:2 * H])
        g_g = jnp.tanh(gates[:, 2 * H:3 * H])
        o_g = jax.nn.sigmoid(gates[:, 3 * H:4 * H])
        c_new = f_g * c + i_g * g_g
        h_new = o_g * jnp.tanh(c_new)
        return (h_new, c_new), h_new

    init = (jnp.zeros((B, H), jnp.float32), jnp.zeros((B, H), jnp.float32))
    _, hs = jax.lax.scan(step, init, x_tbe)
    return jnp.transpose(hs, (1, 0, 2))


if __name__ == "__main__":
    # Small deterministic configuration (seq=16 exercises 2 time blocks of Tt=8).
    batch = 2
    seq = 16
    vocab = 50           # num_embeddings
    emb_dim = 16         # embedding_dim
    hidden = 32          # hidden_dim

    key = jax.random.PRNGKey(0)
    k_emb, k_tok, k_wih, k_whh, k_bih, k_bhh = jax.random.split(key, 6)

    # Deterministic parameter init (PyTorch nn.LSTM uses U(-1/sqrt(H), 1/sqrt(H))).
    bound = 1.0 / (hidden ** 0.5)
    embedding_matrix = jax.random.normal(k_emb, (vocab, emb_dim), jnp.float32)
    # Store weights transposed relative to PyTorch (so kernels do x @ W).
    w_ih = jax.random.uniform(k_wih, (emb_dim, 4 * hidden), jnp.float32, -bound, bound)
    w_hh = jax.random.uniform(k_whh, (hidden, 4 * hidden), jnp.float32, -bound, bound)
    b_ih = jax.random.uniform(k_bih, (4 * hidden,), jnp.float32, -bound, bound)
    b_hh = jax.random.uniform(k_bhh, (4 * hidden,), jnp.float32, -bound, bound)
    bias = (b_ih + b_hh).reshape(1, 4 * hidden)

    # Input token ids, shape (B, T) like `sentence` in the PyTorch module.
    sentence = jax.random.randint(k_tok, (batch, seq), 0, vocab, jnp.int32)

    # Embedding lookup (glue, plain JAX gather) -> (B, T, E)
    emb = jnp.take(embedding_matrix, sentence, axis=0)

    out = lstm_pallas(emb, w_ih, w_hh, bias, time_block=8)
    out = jax.block_until_ready(out)

    ref = lstm_reference(emb, w_ih, w_hh, bias)
    assert out.shape == (batch, seq, hidden)
    assert jnp.allclose(out, ref, atol=1e-5, rtol=1e-5), "mismatch vs reference"

    print("KERNEL_OK")
</pallas_src>

<mosaic_0001>
module attributes {stable_mosaic.version = 11 : i64} {
  func.func @lstm_kernel(%arg0: i32, %arg1: memref<2x8x16xf32, #tpu.memory_space<vmem>>, %arg2: memref<16x128xf32, #tpu.memory_space<vmem>>, %arg3: memref<32x128xf32, #tpu.memory_space<vmem>>, %arg4: memref<1x128xf32, #tpu.memory_space<vmem>>, %arg5: memref<2x8x32xf32, #tpu.memory_space<vmem>>, %arg6: memref<2x32xf32, #tpu.memory_space<vmem>>, %arg7: memref<2x32xf32, #tpu.memory_space<vmem>>) attributes {dimension_semantics = [#tpu.dimension_semantics<arbitrary>], iteration_bounds = array<i64: 2>, scalar_prefetch = 0 : i64, scratch_operands = 2 : i64, tpu.core_type = #tpu.core_type<tc>, window_params = [{transform_indices = @transform_0, window_bounds = array<i64: 2, 8, 16>}, {pipeline_mode = #tpu.pipeline_mode<synchronous>, transform_indices = @transform_1, window_bounds = array<i64: 16, 128>}, {pipeline_mode = #tpu.pipeline_mode<synchronous>, transform_indices = @transform_2, window_bounds = array<i64: 32, 128>}, {pipeline_mode = #tpu.pipeline_mode<synchronous>, transform_indices = @transform_3, window_bounds = array<i64: 1, 128>}, {transform_indices = @transform_4, window_bounds = array<i64: 2, 8, 32>}]} {
    %c0_i32 = arith.constant 0 : i32
    %0 = arith.cmpi eq, %arg0, %c0_i32 : i32
    %1 = arith.extui %0 : i1 to i32
    %c0_i32_0 = arith.constant 0 : i32
    %2 = arith.cmpi ne, %1, %c0_i32_0 : i32
    scf.if %2 {
      %cst_66 = arith.constant 0.000000e+00 : f32
      %272 = vector.broadcast %cst_66 : f32 to vector<2x32xf32>
      %c0_67 = arith.constant 0 : index
      %c0_68 = arith.constant 0 : index
      %273 = vector.load %arg6[%c0_67, %c0_68] : memref<2x32xf32, #tpu.memory_space<vmem>>, vector<2x32xf32>
      tpu.vector_store %arg6[%c0_67, %c0_68], %272 {strides = array<i32>} : memref<2x32xf32, #tpu.memory_space<vmem>>, vector<2x32xf32>,
      %cst_69 = arith.constant 0.000000e+00 : f32
      %274 = vector.broadcast %cst_69 : f32 to vector<2x32xf32>
      %c0_70 = arith.constant 0 : index
      %c0_71 = arith.constant 0 : index
      %275 = vector.load %arg7[%c0_70, %c0_71] : memref<2x32xf32, #tpu.memory_space<vmem>>, vector<2x32xf32>
      tpu.vector_store %arg7[%c0_70, %c0_71], %274 {strides = array<i32>} : memref<2x32xf32, #tpu.memory_space<vmem>>, vector<2x32xf32>,
    } else {
    }
    %c0 = arith.constant 0 : index
    %c0_1 = arith.constant 0 : index
    %3 = vector.load %arg2[%c0, %c0_1] : memref<16x128xf32, #tpu.memory_space<vmem>>, vector<16x128xf32>
    %c0_2 = arith.constant 0 : index
    %c0_3 = arith.constant 0 : index
    %4 = vector.load %arg3[%c0_2, %c0_3] : memref<32x128xf32, #tpu.memory_space<vmem>>, vector<32x128xf32>
    %c0_4 = arith.constant 0 : index
    %c0_5 = arith.constant 0 : index
    %5 = vector.load %arg4[%c0_4, %c0_5] : memref<1x128xf32, #tpu.memory_space<vmem>>, vector<1x128xf32>
    %c0_6 = arith.constant 0 : index
    %c0_7 = arith.constant 0 : index
    %c0_8 = arith.constant 0 : index
    %6 = vector.load %arg1[%c0_6, %c0_7, %c0_8] : memref<2x8x16xf32, #tpu.memory_space<vmem>>, vector<2x8x16xf32>
    %7 = vector.shape_cast %6 : vector<2x8x16xf32> to vector<16x16xf32>
    %cst = arith.constant dense<0.000000e+00> : vector<16x128xf32>
    %8 = tpu.matmul %7, %3, %cst {dimension_numbers = #tpu.dot_dimension_numbers<[1], [0], [0], [1], [0, 0, 1, 1], [], []>} : vector<16x16xf32>, vector<16x128xf32>, vector<16x128xf32> -> vector<16x128xf32>
    %9 = vector.broadcast %5 : vector<1x128xf32> to vector<16x128xf32>
    %10 = arith.addf %8, %9 : vector<16x128xf32>
    %11 = vector.shape_cast %10 : vector<16x128xf32> to vector<2x8x128xf32>
    %c0_9 = arith.constant 0 : index
    %c0_10 = arith.constant 0 : index
    %12 = vector.load %arg6[%c0_9, %c0_10] : memref<2x32xf32, #tpu.memory_space<vmem>>, vector<2x32xf32>
    %c0_11 = arith.constant 0 : index
    %c0_12 = arith.constant 0 : index
    %13 = vector.load %arg7[%c0_11, %c0_12] : memref<2x32xf32, #tpu.memory_space<vmem>>, vector<2x32xf32>
    %14 = vector.extract_strided_slice %11 {offsets = [0, 0, 0], sizes = [2, 1, 128], strides = [1, 1, 1]} : vector<2x8x128xf32> to vector<2x1x128xf32>
    %15 = vector.shape_cast %14 : vector<2x1x128xf32> to vector<2x128xf32>
    %cst_13 = arith.constant dense<0.000000e+00> : vector<2x128xf32>
    %16 = tpu.matmul %12, %4, %cst_13 {dimension_numbers = #tpu.dot_dimension_numbers<[1], [0], [0], [1], [0, 0, 1, 1], [], []>} : vector<2x32xf32>, vector<32x128xf32>, vector<2x128xf32> -> vector<2x128xf32>
    %17 = arith.addf %15, %16 : vector<2x128xf32>
    %18 = vector.extract_strided_slice %17 {offsets = [0, 0], sizes = [2, 32], strides = [1, 1]} : vector<2x128xf32> to vector<2x32xf32>
    %19 = arith.negf %18 : vector<2x32xf32>
    %20 = math.exp %19 : vector<2x32xf32>
    %cst_14 = arith.constant 1.000000e+00 : f32
    %21 = vector.broadcast %cst_14 : f32 to vector<2x32xf32>
    %22 = arith.addf %21, %20 : vector<2x32xf32>
    %23 = arith.divf %21, %22 : vector<2x32xf32>
    %24 = vector.extract_strided_slice %17 {offsets = [0, 32], sizes = [2, 32], strides = [1, 1]} : vector<2x128xf32> to vector<2x32xf32>
    %25 = arith.negf %24 : vector<2x32xf32>
    %26 = math.exp %25 : vector<2x32xf32>
    %cst_15 = arith.constant 1.000000e+00 : f32
    %27 = vector.broadcast %cst_15 : f32 to vector<2x32xf32>
    %28 = arith.addf %27, %26 : vector<2x32xf32>
    %29 = arith.divf %27, %28 : vector<2x32xf32>
    %30 = vector.extract_strided_slice %17 {offsets = [0, 64], sizes = [2, 32], strides = [1, 1]} : vector<2x128xf32> to vector<2x32xf32>
    %31 = math.tanh %30 : vector<2x32xf32>
    %32 = vector.extract_strided_slice %17 {offsets = [0, 96], sizes = [2, 32], strides = [1, 1]} : vector<2x128xf32> to vector<2x32xf32>
    %33 = arith.negf %32 : vector<2x32xf32>
    %34 = math.exp %33 : vector<2x32xf32>
    %cst_16 = arith.constant 1.000000e+00 : f32
    %35 = vector.broadcast %cst_16 : f32 to vector<2x32xf32>
    %36 = arith.addf %35, %34 : vector<2x32xf32>
    %37 = arith.divf %35, %36 : vector<2x32xf32>
    %38 = arith.mulf %29, %13 : vector<2x32xf32>
    %39 = arith.mulf %23, %31 : vector<2x32xf32>
    %40 = arith.addf %38, %39 : vector<2x32xf32>
    %41 = math.tanh %40 : vector<2x32xf32>
    %42 = arith.mulf %37, %41 : vector<2x32xf32>
    %c0_17 = arith.constant 0 : index
    %c0_18 = arith.constant 0 : index
    %c0_19 = arith.constant 0 : index
    %43 = vector.load %arg5[%c0_17, %c0_18, %c0_19] : memref<2x8x32xf32, #tpu.memory_space<vmem>>, vector<2x1x32xf32>
    %44 = vector.shape_cast %43 : vector<2x1x32xf32> to vector<2x32xf32>
    %45 = vector.shape_cast %42 : vector<2x32xf32> to vector<2x1x32xf32>
    tpu.vector_store %arg5[%c0_17, %c0_18, %c0_19], %45 {strides = array<i32>} : memref<2x8x32xf32, #tpu.memory_space<vmem>>, vector<2x1x32xf32>,
    %46 = vector.extract_strided_slice %11 {offsets = [0, 1, 0], sizes = [2, 1, 128], strides = [1, 1, 1]} : vector<2x8x128xf32> to vector<2x1x128xf32>
    %47 = vector.shape_cast %46 : vector<2x1x128xf32> to vector<2x128xf32>
    %cst_20 = arith.constant dense<0.000000e+00> : vector<2x128xf32>
    %48 = tpu.matmul %42, %4, %cst_20 {dimension_numbers = #tpu.dot_dimension_numbers<[1], [0], [0], [1], [0, 0, 1, 1], [], []>} : vector<2x32xf32>, vector<32x128xf32>, vector<2x128xf32> -> vector<2x128xf32>
    %49 = arith.addf %47, %48 : vector<2x128xf32>
    %50 = vector.extract_strided_slice %49 {offsets = [0, 0], sizes = [2, 32], strides = [1, 1]} : vector<2x128xf32> to vector<2x32xf32>
    %51 = arith.negf %50 : vector<2x32xf32>
    %52 = math.exp %51 : vector<2x32xf32>
    %cst_21 = arith.constant 1.000000e+00 : f32
    %53 = vector.broadcast %cst_21 : f32 to vector<2x32xf32>
    %54 = arith.addf %53, %52 : vector<2x32xf32>
    %55 = arith.divf %53, %54 : vector<2x32xf32>
    %56 = vector.extract_strided_slice %49 {offsets = [0, 32], sizes = [2, 32], strides = [1, 1]} : vector<2x128xf32> to vector<2x32xf32>
    %57 = arith.negf %56 : vector<2x32xf32>
    %58 = math.exp %57 : vector<2x32xf32>
    %cst_22 = arith.constant 1.000000e+00 : f32
    %59 = vector.broadcast %cst_22 : f32 to vector<2x32xf32>
    %60 = arith.addf %59, %58 : vector<2x32xf32>
    %61 = arith.divf %59, %60 : vector<2x32xf32>
    %62 = vector.extract_strided_slice %49 {offsets = [0, 64], sizes = [2, 32], strides = [1, 1]} : vector<2x128xf32> to vector<2x32xf32>
    %63 = math.tanh %62 : vector<2x32xf32>
    %64 = vector.extract_strided_slice %49 {offsets = [0, 96], sizes = [2, 32], strides = [1, 1]} : vector<2x128xf32> to vector<2x32xf32>
    %65 = arith.negf %64 : vector<2x32xf32>
    %66 = math.exp %65 : vector<2x32xf32>
    %cst_23 = arith.constant 1.000000e+00 : f32
    %67 = vector.broadcast %cst_23 : f32 to vector<2x32xf32>
    %68 = arith.addf %67, %66 : vector<2x32xf32>
    %69 = arith.divf %67, %68 : vector<2x32xf32>
    %70 = arith.mulf %61, %40 : vector<2x32xf32>
    %71 = arith.mulf %55, %63 : vector<2x32xf32>
    %72 = arith.addf %70, %71 : vector<2x32xf32>
    %73 = math.tanh %72 : vector<2x32xf32>
    %74 = arith.mulf %69, %73 : vector<2x32xf32>
    %c0_24 = arith.constant 0 : index
    %c1 = arith.constant 1 : index
    %c0_25 = arith.constant 0 : index
    %75 = vector.load %arg5[%c0_24, %c1, %c0_25] : memref<2x8x32xf32, #tpu.memory_space<vmem>>, vector<2x1x32xf32>
    %76 = vector.shape_cast %75 : vector<2x1x32xf32> to vector<2x32xf32>
    %77 = vector.shape_cast %74 : vector<2x32xf32> to vector<2x1x32xf32>
    tpu.vector_store %arg5[%c0_24, %c1, %c0_25], %77 {strides = array<i32>} : memref<2x8x32xf32, #tpu.memory_space<vmem>>, vector<2x1x32xf32>,
    %78 = vector.extract_strided_slice %11 {offsets = [0, 2, 0], sizes = [2, 1, 128], strides = [1, 1, 1]} : vector<2x8x128xf32> to vector<2x1x128xf32>
    %79 = vector.shape_cast %78 : vector<2x1x128xf32> to vector<2x128xf32>
    %cst_26 = arith.constant dense<0.000000e+00> : vector<2x128xf32>
    %80 = tpu.matmul %74, %4, %cst_26 {dimension_numbers = #tpu.dot_dimension_numbers<[1], [0], [0], [1], [0, 0, 1, 1], [], []>} : vector<2x32xf32>, vector<32x128xf32>, vector<2x128xf32> -> vector<2x128xf32>
    %81 = arith.addf %79, %80 : vector<2x128xf32>
    %82 = vector.extract_strided_slice %81 {offsets = [0, 0], sizes = [2, 32], strides = [1, 1]} : vector<2x128xf32> to vector<2x32xf32>
    %83 = arith.negf %82 : vector<2x32xf32>
    %84 = math.exp %83 : vector<2x32xf32>
    %cst_27 = arith.constant 1.000000e+00 : f32
    %85 = vector.broadcast %cst_27 : f32 to vector<2x32xf32>
    %86 = arith.addf %85, %84 : vector<2x32xf32>
    %87 = arith.divf %85, %86 : vector<2x32xf32>
    %88 = vector.extract_strided_slice %81 {offsets = [0, 32], sizes = [2, 32], strides = [1, 1]} : vector<2x128xf32> to vector<2x32xf32>
    %89 = arith.negf %88 : vector<2x32xf32>
    %90 = math.exp %89 : vector<2x32xf32>
    %cst_28 = arith.constant 1.000000e+00 : f32
    %91 = vector.broadcast %cst_28 : f32 to vector<2x32xf32>
    %92 = arith.addf %91, %90 : vector<2x32xf32>
    %93 = arith.divf %91, %92 : vector<2x32xf32>
    %94 = vector.extract_strided_slice %81 {offsets = [0, 64], sizes = [2, 32], strides = [1, 1]} : vector<2x128xf32> to vector<2x32xf32>
    %95 = math.tanh %94 : vector<2x32xf32>
    %96 = vector.extract_strided_slice %81 {offsets = [0, 96], sizes = [2, 32], strides = [1, 1]} : vector<2x128xf32> to vector<2x32xf32>
    %97 = arith.negf %96 : vector<2x32xf32>
    %98 = math.exp %97 : vector<2x32xf32>
    %cst_29 = arith.constant 1.000000e+00 : f32
    %99 = vector.broadcast %cst_29 : f32 to vector<2x32xf32>
    %100 = arith.addf %99, %98 : vector<2x32xf32>
    %101 = arith.divf %99, %100 : vector<2x32xf32>
    %102 = arith.mulf %93, %72 : vector<2x32xf32>
    %103 = arith.mulf %87, %95 : vector<2x32xf32>
    %104 = arith.addf %102, %103 : vector<2x32xf32>
    %105 = math.tanh %104 : vector<2x32xf32>
    %106 = arith.mulf %101, %105 : vector<2x32xf32>
    %c0_30 = arith.constant 0 : index
    %c2 = arith.constant 2 : index
    %c0_31 = arith.constant 0 : index
    %107 = vector.load %arg5[%c0_30, %c2, %c0_31] : memref<2x8x32xf32, #tpu.memory_space<vmem>>, vector<2x1x32xf32>
    %108 = vector.shape_cast %107 : vector<2x1x32xf32> to vector<2x32xf32>
    %109 = vector.shape_cast %106 : vector<2x32xf32> to vector<2x1x32xf32>
    tpu.vector_store %arg5[%c0_30, %c2, %c0_31], %109 {strides = array<i32>} : memref<2x8x32xf32, #tpu.memory_space<vmem>>, vector<2x1x32xf32>,
    %110 = vector.extract_strided_slice %11 {offsets = [0, 3, 0], sizes = [2, 1, 128], strides = [1, 1, 1]} : vector<2x8x128xf32> to vector<2x1x128xf32>
    %111 = vector.shape_cast %110 : vector<2x1x128xf32> to vector<2x128xf32>
    %cst_32 = arith.constant dense<0.000000e+00> : vector<2x128xf32>
    %112 = tpu.matmul %106, %4, %cst_32 {dimension_numbers = #tpu.dot_dimension_numbers<[1], [0], [0], [1], [0, 0, 1, 1], [], []>} : vector<2x32xf32>, vector<32x128xf32>, vector<2x128xf32> -> vector<2x128xf32>
    %113 = arith.addf %111, %112 : vector<2x128xf32>
    %114 = vector.extract_strided_slice %113 {offsets = [0, 0], sizes = [2, 32], strides = [1, 1]} : vector<2x128xf32> to vector<2x32xf32>
    %115 = arith.negf %114 : vector<2x32xf32>
    %116 = math.exp %115 : vector<2x32xf32>
    %cst_33 = arith.constant 1.000000e+00 : f32
    %117 = vector.broadcast %cst_33 : f32 to vector<2x32xf32>
    %118 = arith.addf %117, %116 : vector<2x32xf32>
    %119 = arith.divf %117, %118 : vector<2x32xf32>
    %120 = vector.extract_strided_slice %113 {offsets = [0, 32], sizes = [2, 32], strides = [1, 1]} : vector<2x128xf32> to vector<2x32xf32>
    %121 = arith.negf %120 : vector<2x32xf32>
    %122 = math.exp %121 : vector<2x32xf32>
    %cst_34 = arith.constant 1.000000e+00 : f32
    %123 = vector.broadcast %cst_34 : f32 to vector<2x32xf32>
    %124 = arith.addf %123, %122 : vector<2x32xf32>
    %125 = arith.divf %123, %124 : vector<2x32xf32>
    %126 = vector.extract_strided_slice %113 {offsets = [0, 64], sizes = [2, 32], strides = [1, 1]} : vector<2x128xf32> to vector<2x32xf32>
    %127 = math.tanh %126 : vector<2x32xf32>
    %128 = vector.extract_strided_slice %113 {offsets = [0, 96], sizes = [2, 32], strides = [1, 1]} : vector<2x128xf32> to vector<2x32xf32>
    %129 = arith.negf %128 : vector<2x32xf32>
    %130 = math.exp %129 : vector<2x32xf32>
    %cst_35 = arith.constant 1.000000e+00 : f32
    %131 = vector.broadcast %cst_35 : f32 to vector<2x32xf32>
    %132 = arith.addf %131, %130 : vector<2x32xf32>
    %133 = arith.divf %131, %132 : vector<2x32xf32>
    %134 = arith.mulf %125, %104 : vector<2x32xf32>
    %135 = arith.mulf %119, %127 : vector<2x32xf32>
    %136 = arith.addf %134, %135 : vector<2x32xf32>
    %137 = math.tanh %136 : vector<2x32xf32>
    %138 = arith.mulf %133, %137 : vector<2x32xf32>
    %c0_36 = arith.constant 0 : index
    %c3 = arith.constant 3 : index
    %c0_37 = arith.constant 0 : index
    %139 = vector.load %arg5[%c0_36, %c3, %c0_37] : memref<2x8x32xf32, #tpu.memory_space<vmem>>, vector<2x1x32xf32>
    %140 = vector.shape_cast %139 : vector<2x1x32xf32> to vector<2x32xf32>
    %141 = vector.shape_cast %138 : vector<2x32xf32> to vector<2x1x32xf32>
    tpu.vector_store %arg5[%c0_36, %c3, %c0_37], %141 {strides = array<i32>} : memref<2x8x32xf32, #tpu.memory_space<vmem>>, vector<2x1x32xf32>,
    %142 = vector.extract_strided_slice %11 {offsets = [0, 4, 0], sizes = [2, 1, 128], strides = [1, 1, 1]} : vector<2x8x128xf32> to vector<2x1x128xf32>
    %143 = vector.shape_cast %142 : vector<2x1x128xf32> to vector<2x128xf32>
    %cst_38 = arith.constant dense<0.000000e+00> : vector<2x128xf32>
    %144 = tpu.matmul %138, %4, %cst_38 {dimension_numbers = #tpu.dot_dimension_numbers<[1], [0], [0], [1], [0, 0, 1, 1], [], []>} : vector<2x32xf32>, vector<32x128xf32>, vector<2x128xf32> -> vector<2x128xf32>
    %145 = arith.addf %143, %144 : vector<2x128xf32>
    %146 = vector.extract_strided_slice %145 {offsets = [0, 0], sizes = [2, 32], strides = [1, 1]} : vector<2x128xf32> to vector<2x32xf32>
    %147 = arith.negf %146 : vector<2x32xf32>
    %148 = math.exp %147 : vector<2x32xf32>
    %cst_39 = arith.constant 1.000000e+00 : f32
    %149 = vector.broadcast %cst_39 : f32 to vector<2x32xf32>
    %150 = arith.addf %149, %148 : vector<2x32xf32>
    %151 = arith.divf %149, %150 : vector<2x32xf32>
    %152 = vector.extract_strided_slice %145 {offsets = [0, 32], sizes = [2, 32], strides = [1, 1]} : vector<2x128xf32> to vector<2x32xf32>
    %153 = arith.negf %152 : vector<2x32xf32>
    %154 = math.exp %153 : vector<2x32xf32>
    %cst_40 = arith.constant 1.000000e+00 : f32
    %155 = vector.broadcast %cst_40 : f32 to vector<2x32xf32>
    %156 = arith.addf %155, %154 : vector<2x32xf32>
    %157 = arith.divf %155, %156 : vector<2x32xf32>
    %158 = vector.extract_strided_slice %145 {offsets = [0, 64], sizes = [2, 32], strides = [1, 1]} : vector<2x128xf32> to vector<2x32xf32>
    %159 = math.tanh %158 : vector<2x32xf32>
    %160 = vector.extract_strided_slice %145 {offsets = [0, 96], sizes = [2, 32], strides = [1, 1]} : vector<2x128xf32> to vector<2x32xf32>
    %161 = arith.negf %160 : vector<2x32xf32>
    %162 = math.exp %161 : vector<2x32xf32>
    %cst_41 = arith.constant 1.000000e+00 : f32
    %163 = vector.broadcast %cst_41 : f32 to vector<2x32xf32>
    %164 = arith.addf %163, %162 : vector<2x32xf32>
    %165 = arith.divf %163, %164 : vector<2x32xf32>
    %166 = arith.mulf %157, %136 : vector<2x32xf32>
    %167 = arith.mulf %151, %159 : vector<2x32xf32>
    %168 = arith.addf %166, %167 : vector<2x32xf32>
    %169 = math.tanh %168 : vector<2x32xf32>
    %170 = arith.mulf %165, %169 : vector<2x32xf32>
    %c0_42 = arith.constant 0 : index
    %c4 = arith.constant 4 : index
    %c0_43 = arith.constant 0 : index
    %171 = vector.load %arg5[%c0_42, %c4, %c0_43] : memref<2x8x32xf32, #tpu.memory_space<vmem>>, vector<2x1x32xf32>
    %172 = vector.shape_cast %171 : vector<2x1x32xf32> to vector<2x32xf32>
    %173 = vector.shape_cast %170 : vector<2x32xf32> to vector<2x1x32xf32>
    tpu.vector_store %arg5[%c0_42, %c4, %c0_43], %173 {strides = array<i32>} : memref<2x8x32xf32, #tpu.memory_space<vmem>>, vector<2x1x32xf32>,
    %174 = vector.extract_strided_slice %11 {offsets = [0, 5, 0], sizes = [2, 1, 128], strides = [1, 1, 1]} : vector<2x8x128xf32> to vector<2x1x128xf32>
    %175 = vector.shape_cast %174 : vector<2x1x128xf32> to vector<2x128xf32>
    %cst_44 = arith.constant dense<0.000000e+00> : vector<2x128xf32>
    %176 = tpu.matmul %170, %4, %cst_44 {dimension_numbers = #tpu.dot_dimension_numbers<[1], [0], [0], [1], [0, 0, 1, 1], [], []>} : vector<2x32xf32>, vector<32x128xf32>, vector<2x128xf32> -> vector<2x128xf32>
    %177 = arith.addf %175, %176 : vector<2x128xf32>
    %178 = vector.extract_strided_slice %177 {offsets = [0, 0], sizes = [2, 32], strides = [1, 1]} : vector<2x128xf32> to vector<2x32xf32>
    %179 = arith.negf %178 : vector<2x32xf32>
    %180 = math.exp %179 : vector<2x32xf32>
    %cst_45 = arith.constant 1.000000e+00 : f32
    %181 = vector.broadcast %cst_45 : f32 to vector<2x32xf32>
    %182 = arith.addf %181, %180 : vector<2x32xf32>
    %183 = arith.divf %181, %182 : vector<2x32xf32>
    %184 = vector.extract_strided_slice %177 {offsets = [0, 32], sizes = [2, 32], strides = [1, 1]} : vector<2x128xf32> to vector<2x32xf32>
    %185 = arith.negf %184 : vector<2x32xf32>
    %186 = math.exp %185 : vector<2x32xf32>
    %cst_46 = arith.constant 1.000000e+00 : f32
    %187 = vector.broadcast %cst_46 : f32 to vector<2x32xf32>
    %188 = arith.addf %187, %186 : vector<2x32xf32>
    %189 = arith.divf %187, %188 : vector<2x32xf32>
    %190 = vector.extract_strided_slice %177 {offsets = [0, 64], sizes = [2, 32], strides = [1, 1]} : vector<2x128xf32> to vector<2x32xf32>
    %191 = math.tanh %190 : vector<2x32xf32>
    %192 = vector.extract_strided_slice %177 {offsets = [0, 96], sizes = [2, 32], strides = [1, 1]} : vector<2x128xf32> to vector<2x32xf32>
    %193 = arith.negf %192 : vector<2x32xf32>
    %194 = math.exp %193 : vector<2x32xf32>
    %cst_47 = arith.constant 1.000000e+00 : f32
    %195 = vector.broadcast %cst_47 : f32 to vector<2x32xf32>
    %196 = arith.addf %195, %194 : vector<2x32xf32>
    %197 = arith.divf %195, %196 : vector<2x32xf32>
    %198 = arith.mulf %189, %168 : vector<2x32xf32>
    %199 = arith.mulf %183, %191 : vector<2x32xf32>
    %200 = arith.addf %198, %199 : vector<2x32xf32>
    %201 = math.tanh %200 : vector<2x32xf32>
    %202 = arith.mulf %197, %201 : vector<2x32xf32>
    %c0_48 = arith.constant 0 : index
    %c5 = arith.constant 5 : index
    %c0_49 = arith.constant 0 : index
    %203 = vector.load %arg5[%c0_48, %c5, %c0_49] : memref<2x8x32xf32, #tpu.memory_space<vmem>>, vector<2x1x32xf32>
    %204 = vector.shape_cast %203 : vector<2x1x32xf32> to vector<2x32xf32>
    %205 = vector.shape_cast %202 : vector<2x32xf32> to vector<2x1x32xf32>
    tpu.vector_store %arg5[%c0_48, %c5, %c0_49], %205 {strides = array<i32>} : memref<2x8x32xf32, #tpu.memory_space<vmem>>, vector<2x1x32xf32>,
    %206 = vector.extract_strided_slice %11 {offsets = [0, 6, 0], sizes = [2, 1, 128], strides = [1, 1, 1]} : vector<2x8x128xf32> to vector<2x1x128xf32>
    %207 = vector.shape_cast %206 : vector<2x1x128xf32> to vector<2x128xf32>
    %cst_50 = arith.constant dense<0.000000e+00> : vector<2x128xf32>
    %208 = tpu.matmul %202, %4, %cst_50 {dimension_numbers = #tpu.dot_dimension_numbers<[1], [0], [0], [1], [0, 0, 1, 1], [], []>} : vector<2x32xf32>, vector<32x128xf32>, vector<2x128xf32> -> vector<2x128xf32>
    %209 = arith.addf %207, %208 : vector<2x128xf32>
    %210 = vector.extract_strided_slice %209 {offsets = [0, 0], sizes = [2, 32], strides = [1, 1]} : vector<2x128xf32> to vector<2x32xf32>
    %211 = arith.negf %210 : vector<2x32xf32>
    %212 = math.exp %211 : vector<2x32xf32>
    %cst_51 = arith.constant 1.000000e+00 : f32
    %213 = vector.broadcast %cst_51 : f32 to vector<2x32xf32>
    %214 = arith.addf %213, %212 : vector<2x32xf32>
    %215 = arith.divf %213, %214 : vector<2x32xf32>
    %216 = vector.extract_strided_slice %209 {offsets = [0, 32], sizes = [2, 32], strides = [1, 1]} : vector<2x128xf32> to vector<2x32xf32>
    %217 = arith.negf %216 : vector<2x32xf32>
    %218 = math.exp %217 : vector<2x32xf32>
    %cst_52 = arith.constant 1.000000e+00 : f32
    %219 = vector.broadcast %cst_52 : f32 to vector<2x32xf32>
    %220 = arith.addf %219, %218 : vector<2x32xf32>
    %221 = arith.divf %219, %220 : vector<2x32xf32>
    %222 = vector.extract_strided_slice %209 {offsets = [0, 64], sizes = [2, 32], strides = [1, 1]} : vector<2x128xf32> to vector<2x32xf32>
    %223 = math.tanh %222 : vector<2x32xf32>
    %224 = vector.extract_strided_slice %209 {offsets = [0, 96], sizes = [2, 32], strides = [1, 1]} : vector<2x128xf32> to vector<2x32xf32>
    %225 = arith.negf %224 : vector<2x32xf32>
    %226 = math.exp %225 : vector<2x32xf32>
    %cst_53 = arith.constant 1.000000e+00 : f32
    %227 = vector.broadcast %cst_53 : f32 to vector<2x32xf32>
    %228 = arith.addf %227, %226 : vector<2x32xf32>
    %229 = arith.divf %227, %228 : vector<2x32xf32>
    %230 = arith.mulf %221, %200 : vector<2x32xf32>
    %231 = arith.mulf %215, %223 : vector<2x32xf32>
    %232 = arith.addf %230, %231 : vector<2x32xf32>
    %233 = math.tanh %232 : vector<2x32xf32>
    %234 = arith.mulf %229, %233 : vector<2x32xf32>
    %c0_54 = arith.constant 0 : index
    %c6 = arith.constant 6 : index
    %c0_55 = arith.constant 0 : index
    %235 = vector.load %arg5[%c0_54, %c6, %c0_55] : memref<2x8x32xf32, #tpu.memory_space<vmem>>, vector<2x1x32xf32>
    %236 = vector.shape_cast %235 : vector<2x1x32xf32> to vector<2x32xf32>
    %237 = vector.shape_cast %234 : vector<2x32xf32> to vector<2x1x32xf32>
    tpu.vector_store %arg5[%c0_54, %c6, %c0_55], %237 {strides = array<i32>} : memref<2x8x32xf32, #tpu.memory_space<vmem>>, vector<2x1x32xf32>,
    %238 = vector.extract_strided_slice %11 {offsets = [0, 7, 0], sizes = [2, 1, 128], strides = [1, 1, 1]} : vector<2x8x128xf32> to vector<2x1x128xf32>
    %239 = vector.shape_cast %238 : vector<2x1x128xf32> to vector<2x128xf32>
    %cst_56 = arith.constant dense<0.000000e+00> : vector<2x128xf32>
    %240 = tpu.matmul %234, %4, %cst_56 {dimension_numbers = #tpu.dot_dimension_numbers<[1], [0], [0], [1], [0, 0, 1, 1], [], []>} : vector<2x32xf32>, vector<32x128xf32>, vector<2x128xf32> -> vector<2x128xf32>
    %241 = arith.addf %239, %240 : vector<2x128xf32>
    %242 = vector.extract_strided_slice %241 {offsets = [0, 0], sizes = [2, 32], strides = [1, 1]} : vector<2x128xf32> to vector<2x32xf32>
    %243 = arith.negf %242 : vector<2x32xf32>
    %244 = math.exp %243 : vector<2x32xf32>
    %cst_57 = arith.constant 1.000000e+00 : f32
    %245 = vector.broadcast %cst_57 : f32 to vector<2x32xf32>
    %246 = arith.addf %245, %244 : vector<2x32xf32>
    %247 = arith.divf %245, %246 : vector<2x32xf32>
    %248 = vector.extract_strided_slice %241 {offsets = [0, 32], sizes = [2, 32], strides = [1, 1]} : vector<2x128xf32> to vector<2x32xf32>
    %249 = arith.negf %248 : vector<2x32xf32>
    %250 = math.exp %249 : vector<2x32xf32>
    %cst_58 = arith.constant 1.000000e+00 : f32
    %251 = vector.broadcast %cst_58 : f32 to vector<2x32xf32>
    %252 = arith.addf %251, %250 : vector<2x32xf32>
    %253 = arith.divf %251, %252 : vector<2x32xf32>
    %254 = vector.extract_strided_slice %241 {offsets = [0, 64], sizes = [2, 32], strides = [1, 1]} : vector<2x128xf32> to vector<2x32xf32>
    %255 = math.tanh %254 : vector<2x32xf32>
    %256 = vector.extract_strided_slice %241 {offsets = [0, 96], sizes = [2, 32], strides = [1, 1]} : vector<2x128xf32> to vector<2x32xf32>
    %257 = arith.negf %256 : vector<2x32xf32>
    %258 = math.exp %257 : vector<2x32xf32>
    %cst_59 = arith.constant 1.000000e+00 : f32
    %259 = vector.broadcast %cst_59 : f32 to vector<2x32xf32>
    %260 = arith.addf %259, %258 : vector<2x32xf32>
    %261 = arith.divf %259, %260 : vector<2x32xf32>
    %262 = arith.mulf %253, %232 : vector<2x32xf32>
    %263 = arith.mulf %247, %255 : vector<2x32xf32>
    %264 = arith.addf %262, %263 : vector<2x32xf32>
    %265 = math.tanh %264 : vector<2x32xf32>
    %266 = arith.mulf %261, %265 : vector<2x32xf32>
    %c0_60 = arith.constant 0 : index
    %c7 = arith.constant 7 : index
    %c0_61 = arith.constant 0 : index
    %267 = vector.load %arg5[%c0_60, %c7, %c0_61] : memref<2x8x32xf32, #tpu.memory_space<vmem>>, vector<2x1x32xf32>
    %268 = vector.shape_cast %267 : vector<2x1x32xf32> to vector<2x32xf32>
    %269 = vector.shape_cast %266 : vector<2x32xf32> to vector<2x1x32xf32>
    tpu.vector_store %arg5[%c0_60, %c7, %c0_61], %269 {strides = array<i32>} : memref<2x8x32xf32, #tpu.memory_space<vmem>>, vector<2x1x32xf32>,
    %c0_62 = arith.constant 0 : index
    %c0_63 = arith.constant 0 : index
    %270 = vector.load %arg6[%c0_62, %c0_63] : memref<2x32xf32, #tpu.memory_space<vmem>>, vector<2x32xf32>
    tpu.vector_store %arg6[%c0_62, %c0_63], %266 {strides = array<i32>} : memref<2x32xf32, #tpu.memory_space<vmem>>, vector<2x32xf32>,
    %c0_64 = arith.constant 0 : index
    %c0_65 = arith.constant 0 : index
    %271 = vector.load %arg7[%c0_64, %c0_65] : memref<2x32xf32, #tpu.memory_space<vmem>>, vector<2x32xf32>
    tpu.vector_store %arg7[%c0_64, %c0_65], %264 {strides = array<i32>} : memref<2x32xf32, #tpu.memory_space<vmem>>, vector<2x32xf32>,
    return
  }
  func.func @transform_0(%arg0: i32) -> (i32, i32, i32) {
    %c0_i32 = arith.constant 0 : i32
    %c0_i32_0 = arith.constant 0 : i32
    %c0_i32_1 = arith.constant 0 : i32
    return %c0_i32, %arg0, %c0_i32_0 : i32, i32, i32
  }
  func.func @transform_1(%arg0: i32) -> (i32, i32) {
    %c0_i32 = arith.constant 0 : i32
    %c0_i32_0 = arith.constant 0 : i32
    %c0_i32_1 = arith.constant 0 : i32
    return %c0_i32, %c0_i32_0 : i32, i32
  }
  func.func @transform_2(%arg0: i32) -> (i32, i32) {
    %c0_i32 = arith.constant 0 : i32
    %c0_i32_0 = arith.constant 0 : i32
    %c0_i32_1 = arith.constant 0 : i32
    return %c0_i32, %c0_i32_0 : i32, i32
  }
  func.func @transform_3(%arg0: i32) -> (i32, i32) {
    %c0_i32 = arith.constant 0 : i32
    %c0_i32_0 = arith.constant 0 : i32
    %c0_i32_1 = arith.constant 0 : i32
    return %c0_i32, %c0_i32_0 : i32, i32
  }
  func.func @transform_4(%arg0: i32) -> (i32, i32, i32) {
    %c0_i32 = arith.constant 0 : i32
    %c0_i32_0 = arith.constant 0 : i32
    %c0_i32_1 = arith.constant 0 : i32
    return %c0_i32, %arg0, %c0_i32_0 : i32, i32, i32
  }
}

</mosaic_0001>

<llo_original>
// kernel: tpu_custom_call.1
$region0: #{tpu_custom_call.1}
  #allocation0 [shape = 'u32[]', space=smem, size = 0x4, offset = 0x4, fixed_abs, tag = 'smem constant byte address 0x4 - core index']
  #allocation1 [shape = 'u32[144,128]{1,0:T(1,128)}', space=vmem, size = 0x12000, scoped, tag = 'internal scratch']
  #allocation2 [shape = 'f32[2,32]{1,0:T(2,128)}', space=vmem, size = 0x400, scoped, tag = 'scratch operand']
  #allocation3 [shape = 'f32[2,32]{1,0:T(2,128)}', space=vmem, size = 0x400, scoped, tag = 'scratch operand']
  %s0 = inlined_call_operand.hbm [shape: f32[2,16,16], index: 0, kind: input, shape index: {}]
  %s1 = inlined_call_operand.hbm [shape: f32[16,128], index: 1, kind: input, shape index: {}]
  %s2 = inlined_call_operand.hbm [shape: f32[32,128], index: 2, kind: input, shape index: {}]
  %s3 = inlined_call_operand.vmem [shape: f32[1,128], index: 3, kind: input, shape index: {}]
  %s4 = inlined_call_operand.hbm [shape: f32[2,16,32], index: 4, kind: output, shape index: {}]
  %s5 = sld [smem:[#allocation0]]
  $region65: #{tpu_custom_call.1} parent=0
    _
  %s7 = ssub.s32 1, %s5
  %s8 = scalar_select 0, %s7, %s5
  $region1: #{tpu_custom_call.1} parent=0
    #allocation4 [shape = 'u8[16384]{0}', space=vmem, size = 0x4000, scoped, tag = 'input window, operand 0']
    #allocation5 [shape = 's32[2]{0}', space=sflag, size = 0x8, scoped, tag = 'scoped memory for tpu_custom_call.1']
    #allocation6 [shape = 's32[2]{0}', space=sflag, size = 0x8, scoped, tag = 'scoped memory for tpu_custom_call.1']
    #allocation7 [shape = 'u8[8192]{0}', space=vmem, size = 0x2000, scoped, tag = 'input window, operand 1, single buffered']
    #allocation8 [shape = 's32[1]{0}', space=sflag, size = 0x4, scoped, tag = 'scoped memory for tpu_custom_call.1']
    #allocation9 [shape = 'u8[16384]{0}', space=vmem, size = 0x4000, scoped, tag = 'input window, operand 2, single buffered']
    #allocation10 [shape = 'u8[16384]{0}', space=vmem, size = 0x4000, scoped, tag = 'output window, operand 0']
    %9 = vsyncpa [#allocation5], 0
    %s10 = scalar_lea.sflag [#allocation5], 1
    %11 = vsyncpa %s10, 0
    %12 = vsyncpa [#allocation8], 0
    %13 = vsyncpa [#allocation6], 0
    %s14 = scalar_lea.sflag [#allocation6], 1
    %15 = vsyncpa %s14, 0
    loop: start=0, step=1, limit=4
    $region2: #{tpu_custom_call.1} parent=1 // loop_pre_header
      _
    $region3: #{tpu_custom_call.1} parent=1 // loop_header
      %s17 = sphi 0, %s21
      %p18 = scmp.ge.s32.totalorder %s17, 4
      %s27 = sphi 0, %s29
      %s30 = sphi 0, %s27
      %s31 = sphi 0, %s30
      %s47 = sphi 0, %s31
      %s51 = sphi 0, %s51
      %s53 = sphi 0, %s51
      %s54 = sphi 0, %s53
      %s68 = sphi 0, %s54
      %s72 = sphi 0, %s72
      %s74 = sphi 0, %s72
      %s75 = sphi 0, %s74
      %s89 = sphi 0, %s75
      %s93 = sphi 0, %s93
      %s95 = sphi 0, %s93
      %s96 = sphi 0, %s95
      %s110 = sphi 0, %s96
      %s116 = sphi 0, %s118
      %s119 = sphi 0, %s116
      %s120 = sphi 0, %s119
      %s136 = sphi 0, %s120
    $region4: #{tpu_custom_call.1} parent=1 // loop_header_branch
      %20 = sbr.rel (%p18) target = $region8
    $region5: #{tpu_custom_call.1} parent=1 // loop_body
      %s22 = ssub.s32 %s17, 1
      %s23 = ssub.s32 %s17, 2
      %s24 = sadd.s32 %s17, 1
      %s25 = ssub.s32 %s17, %s24
      %p26 = scmp.eq.s32.totalorder %s25, 0
      %s28 = sadd.s32 %s27, 1
      %s29 = scalar_select %p26, %s27, %s28
      %p32 = pneg %p26
      %p33 = scmp.eq.s32.totalorder %s17, 1
      %p34 = por %p32, %p33
      %p35 = scmp.ne.s32.totalorder %s27, %s30
      %p36 = scmp.eq.s32.totalorder %s17, 0
      %p37 = por %p35, %p36
      %p38 = scmp.ne.s32.totalorder %s27, %s30
      %p39 = scmp.eq.s32.totalorder %s22, 1
      %p40 = por %p38, %p39
      %p41 = scmp.ne.s32.totalorder %s30, %s31
      %p42 = scmp.eq.s32.totalorder %s22, 0
      %p43 = por %p41, %p42
      %p44 = scmp.ne.s32.totalorder %s30, %s31
      %p45 = scmp.eq.s32.totalorder %s23, 1
      %p46 = por %p44, %p45
      %p48 = scmp.ne.s32.totalorder %s31, %s47
      %p49 = scmp.eq.s32.totalorder %s23, 0
      %p50 = por %p48, %p49
      %s52 = sadd.s32 %s51, 1
      %p55 = scmp.eq.s32.totalorder %s17, 1
      %p56 = scmp.ne.s32.totalorder %s51, %s53
      %p57 = scmp.eq.s32.totalorder %s17, 0
      %p58 = por %p56, %p57
      %p59 = scmp.ne.s32.totalorder %s51, %s53
      %p60 = scmp.eq.s32.totalorder %s22, 1
      %p61 = por %p59, %p60
      %p62 = scmp.ne.s32.totalorder %s53, %s54
      %p63 = scmp.eq.s32.totalorder %s22, 0
      %p64 = por %p62, %p63
      %p65 = scmp.ne.s32.totalorder %s53, %s54
      %p66 = scmp.eq.s32.totalorder %s23, 1
      %p67 = por %p65, %p66
      %p69 = scmp.ne.s32.totalorder %s54, %s68
      %p70 = scmp.eq.s32.totalorder %s23, 0
      %p71 = por %p69, %p70
      %s73 = sadd.s32 %s72, 1
      %p76 = scmp.eq.s32.totalorder %s17, 1
      %p77 = scmp.ne.s32.totalorder %s72, %s74
      %p78 = scmp.eq.s32.totalorder %s17, 0
      %p79 = por %p77, %p78
      %p80 = scmp.ne.s32.totalorder %s72, %s74
      %p81 = scmp.eq.s32.totalorder %s22, 1
      %p82 = por %p80, %p81
      %p83 = scmp.ne.s32.totalorder %s74, %s75
      %p84 = scmp.eq.s32.totalorder %s22, 0
      %p85 = por %p83, %p84
      %p86 = scmp.ne.s32.totalorder %s74, %s75
      %p87 = scmp.eq.s32.totalorder %s23, 1
      %p88 = por %p86, %p87
      %p90 = scmp.ne.s32.totalorder %s75, %s89
      %p91 = scmp.eq.s32.totalorder %s23, 0
      %p92 = por %p90, %p91
      %s94 = sadd.s32 %s93, 1
      %p97 = scmp.eq.s32.totalorder %s17, 1
      %p98 = scmp.ne.s32.totalorder %s93, %s95
      %p99 = scmp.eq.s32.totalorder %s17, 0
      %p100 = por %p98, %p99
      %p101 = scmp.ne.s32.totalorder %s93, %s95
      %p102 = scmp.eq.s32.totalorder %s22, 1
      %p103 = por %p101, %p102
      %p104 = scmp.ne.s32.totalorder %s95, %s96
      %p105 = scmp.eq.s32.totalorder %s22, 0
      %p106 = por %p104, %p105
      %p107 = scmp.ne.s32.totalorder %s95, %s96
      %p108 = scmp.eq.s32.totalorder %s23, 1
      %p109 = por %p107, %p108
      %p111 = scmp.ne.s32.totalorder %s96, %s110
      %p112 = scmp.eq.s32.totalorder %s23, 0
      %p113 = por %p111, %p112
      %s114 = ssub.s32 %s17, %s24
      %p115 = scmp.eq.s32.totalorder %s114, 0
      %s117 = sadd.s32 %s116, 1
      %s118 = scalar_select %p115, %s116, %s117
      %p121 = pneg %p115
      %p122 = scmp.eq.s32.totalorder %s17, 1
      %p123 = por %p121, %p122
      %p124 = scmp.ne.s32.totalorder %s116, %s119
      %p125 = scmp.eq.s32.totalorder %s17, 0
      %p126 = por %p124, %p125
      %p127 = scmp.ne.s32.totalorder %s116, %s119
      %p128 = scmp.eq.s32.totalorder %s22, 1
      %p129 = por %p127, %p128
      %p130 = scmp.ne.s32.totalorder %s119, %s120
      %p131 = scmp.eq.s32.totalorder %s22, 0
      %p132 = por %p130, %p131
      %p133 = scmp.ne.s32.totalorder %s119, %s120
      %p134 = scmp.eq.s32.totalorder %s23, 1
      %p135 = por %p133, %p134
      %p137 = scmp.ne.s32.totalorder %s120, %s136
      %p138 = scmp.eq.s32.totalorder %s23, 0
      %p139 = por %p137, %p138
      %p140 = scmp.le.s32.totalorder 1, %s17
      %p141 = scmp.lt.s32.totalorder %s17, 3
      %p142 = pnand %p140, %p141
      %p143 = pneg %p142
      // Predicated region
      $region9: #{tpu_custom_call.1} parent=5 // pred_check
        _
      $region10: #{tpu_custom_call.1} parent=5 // pred_check_branch
        %145 = sbr.rel (%p142) target = $region12
      $region11: #{tpu_custom_call.1} parent=5 // pred_region
        %s146 = ssub.s32 %s17, 1
        // Predicated region
        $region13: #{tpu_custom_call.1} parent=11 // pred_check
          %p147 = pneg %p64
        $region14: #{tpu_custom_call.1} parent=11 // pred_check_branch
          %149 = sbr.rel (%p147) target = $region16
        $region15: #{tpu_custom_call.1} parent=11 // pred_region
          %s151 = ssub.s32 256, 256
          %152 = vsyncadd [#allocation8], %s151
          %s153 = sshll.u32 [#allocation7], 4
          %s154 = int_to_ptr.vmem [resolvable:$true] %s153
          %159 = dma.hbm_to_vmem [thread:$0]  %s1, 256, %s154, [#allocation8], 128, 128, 8
        $region16: #{tpu_custom_call.1} parent=11 // pred_fallthru
          _
        // Predicated region
        $region17: #{tpu_custom_call.1} parent=11 // pred_check
          %p160 = pneg %p85
        $region18: #{tpu_custom_call.1} parent=11 // pred_check_branch
          %162 = sbr.rel (%p160) target = $region20
        $region19: #{tpu_custom_call.1} parent=11 // pred_region
          %s164 = ssub.s32 512, 512
          %165 = vsyncadd [#allocation8], %s164
          %s166 = sshll.u32 [#allocation9], 4
          %s167 = int_to_ptr.vmem [resolvable:$true] %s166
          %172 = dma.hbm_to_vmem [thread:$0]  %s2, 512, %s167, [#allocation8], 128, 128, 8
        $region20: #{tpu_custom_call.1} parent=11 // pred_fallthru
          _
        // Predicated region
        $region21: #{tpu_custom_call.1} parent=11 // pred_check
          %p173 = pneg %p106
        $region22: #{tpu_custom_call.1} parent=11 // pred_check_branch
          %175 = sbr.rel (%p173) target = $region24
        $region23: #{tpu_custom_call.1} parent=11 // pred_region
          _
        $region24: #{tpu_custom_call.1} parent=11 // pred_fallthru
          _
      $region12: #{tpu_custom_call.1} parent=5 // pred_fallthru
        _
      %p176 = scmp.lt.s32.totalorder %s17, 2
      // Predicated region
      $region25: #{tpu_custom_call.1} parent=5 // pred_check
        %p177 = pneg %p176
      $region26: #{tpu_custom_call.1} parent=5 // pred_check_branch
        %179 = sbr.rel (%p177) target = $region28
      $region27: #{tpu_custom_call.1} parent=5 // pred_region
        // Predicated region
        $region29: #{tpu_custom_call.1} parent=27 // pred_check
          %p180 = pneg %p37
        $region30: #{tpu_custom_call.1} parent=27 // pred_check_branch
          %182 = sbr.rel (%p180) target = $region32
        $region31: #{tpu_custom_call.1} parent=27 // pred_region
          %s183 = sand.u32 %s27, 1
          %s184 = scalar_lea.sflag [#allocation5], %s183
          %s185 = sand.u32 %s27, 1
          %s186 = smul.addr %s185, 16
          %s187 = scalar_lea.vmem [#allocation4], %s186
          %s189 = ssub.s32 256, 256
          %190 = vsyncadd %s184, %s189
          %s191 = smul.addr %s17, 128
          %s192 = scalar_lea.hbm %s0, %s191
          %s193 = sshll.u32 %s187, 4
          %s194 = int_to_ptr.vmem [resolvable:$true] %s193
          %199 = dma.hbm_to_vmem [thread:$0]  %s192, 256, %s194, %s184, 256, 128, 8
        $region32: #{tpu_custom_call.1} parent=27 // pred_fallthru
          _
      $region28: #{tpu_custom_call.1} parent=5 // pred_fallthru
        _
      %p200 = scmp.le.s32.totalorder 1, %s17
      %p201 = scmp.lt.s32.totalorder %s17, 3
      %p202 = pnand %p200, %p201
      %p203 = pneg %p202
      // Predicated region
      $region33: #{tpu_custom_call.1} parent=5 // pred_check
        _
      $region34: #{tpu_custom_call.1} parent=5 // pred_check_branch
        %205 = sbr.rel (%p202) target = $region36
      $region35: #{tpu_custom_call.1} parent=5 // pred_region
        %s206 = ssub.s32 %s17, 1
        %s207 = sand.u32 %s30, 1
        %s208 = scalar_lea.sflag [#allocation5], %s207
        %s209 = sand.u32 %s30, 1
        %s210 = smul.addr %s209, 16
        %s211 = scalar_lea.vmem [#allocation4], %s210
        // Predicated region
        $region37: #{tpu_custom_call.1} parent=35 // pred_check
          %p212 = pneg %p43
        $region38: #{tpu_custom_call.1} parent=35 // pred_check_branch
          %214 = sbr.rel (%p212) target = $region40
        $region39: #{tpu_custom_call.1} parent=35 // pred_region
          %215 = dma.done %s208, 256
        $region40: #{tpu_custom_call.1} parent=35 // pred_fallthru
          _
        // Predicated region
        $region41: #{tpu_custom_call.1} parent=35 // pred_check
          %p216 = pneg %p64
        $region42: #{tpu_custom_call.1} parent=35 // pred_check_branch
          %218 = sbr.rel (%p216) target = $region44
        $region43: #{tpu_custom_call.1} parent=35 // pred_region
          %219 = dma.done [#allocation8], 256
        $region44: #{tpu_custom_call.1} parent=35 // pred_fallthru
          _
        // Predicated region
        $region45: #{tpu_custom_call.1} parent=35 // pred_check
          %p220 = pneg %p85
        $region46: #{tpu_custom_call.1} parent=35 // pred_check_branch
          %222 = sbr.rel (%p220) target = $region48
        $region47: #{tpu_custom_call.1} parent=35 // pred_region
          %223 = dma.done [#allocation8], 512
        $region48: #{tpu_custom_call.1} parent=35 // pred_fallthru
          _
        %s224 = sand.u32 %s30, 1
        %s225 = scalar_lea.sflag [#allocation5], %s224
        %s226 = sand.u32 %s30, 1
        %s227 = smul.addr %s226, 16
        %s228 = scalar_lea.vmem [#allocation4], %s227
        %p229 = pneg %p43
        %p230 = pneg %p40
        %p231 = pneg %p64
        %p232 = pneg %p61
        %p233 = pneg %p85
        %p234 = pneg %p82
        %p235 = pneg %p106
        %p236 = pneg %p103
        %p237 = pneg %p132
        %p238 = pneg %p129
        %s239 = sand.u32 %s119, 1
        %s240 = scalar_lea.sflag [#allocation6], %s239
        %s241 = sand.u32 %s119, 1
        %s242 = smul.addr %s241, 16
        %s243 = scalar_lea.vmem [#allocation10], %s242
        %p244 = scmp.eq.s32.totalorder %s22, 0
        // Predicated region
        $region49: #{tpu_custom_call.1} parent=35 // pred_check
          %p245 = pneg %p244
        $region50: #{tpu_custom_call.1} parent=35 // pred_check_branch
          %247 = sbr.rel (%p245) target = $region52
        $region51: #{tpu_custom_call.1} parent=35 // pred_region
          %vm248 = vcmask 254976
          %249 = vst.msk [vmem:[#allocation2] sm:$0x3] %vm248, 0.0
          %250 = vst.msk [vmem:[#allocation3] sm:$0x3] %vm248, 0.0
        $region52: #{tpu_custom_call.1} parent=35 // pred_fallthru
          _
        %v251 = vld [vmem:[#allocation7] sm:$0xff]
        %v252 = vld [vmem:[#allocation7 + $0x8] sm:$0xff]
        %v253 = vld [vmem:[#allocation9] sm:$0xff]
        %v254 = vld [vmem:[#allocation9 + $0x8] sm:$0xff]
        %v255 = vld [vmem:[#allocation9 + $0x10] sm:$0xff]
        %v256 = vld [vmem:[#allocation9 + $0x18] sm:$0xff]
        %v257 = vld [vmem:[%s3] sm:$0x1]
        %v258 = vld [vmem:[%s211] sm:$0xff]
        %v259 = vld [vmem:[%s211 + $0x8] sm:$0xff]
        %v261 = vlaneseq
        %v262 = vshrl.u32 %v261, 7
        %v263 = vsub.s32 0, %v262
        %v264 = vrot.slane %v257, %v263
        %vm266 = vcmask 130048
        %v268 = vsel %vm266, %v258, 0
        %v271 = vsel %vm266, %v259, 0
        %273 = vmatprep.subr.mxu0 0.0
        %274 = vmatpush1.msra.mxu0 %v251
        %275 = vmatprep.subr.mxu0 0.0
        %276 = vmatpush1.msra.mxu0 %v252
        %277 = vmatprep.subr.mxu0 0.0
        %278 = vmatpush1.msra.mxu0 0.0
        %279 = vmatprep.subr.mxu0 0.0
        %280 = vmatpush1.msra.mxu0 0.0
        %281 = vmatprep.subr.mxu0 0.0
        %282 = vmatpush1.msra.mxu0 0.0
        %283 = vmatprep.subr.mxu0 0.0
        %284 = vmatpush1.msra.mxu0 0.0
        %285 = vmatprep.subr.mxu0 0.0
        %286 = vmatpush1.msra.mxu0 0.0
        %287 = vmatprep.subr.mxu0 0.0
        %288 = vmatpush1.msra.mxu0 0.0
        %289 = vmatprep.subr.mxu0 0.0
        %290 = vmatpush1.msra.mxu0 0.0
        %291 = vmatprep.subr.mxu0 0.0
        %292 = vmatpush1.msra.mxu0 0.0
        %293 = vmatprep.subr.mxu0 0.0
        %294 = vmatpush1.msra.mxu0 0.0
        %295 = vmatprep.subr.mxu0 0.0
        %296 = vmatpush1.msra.mxu0 0.0
        %297 = vmatprep.subr.mxu0 0.0
        %298 = vmatpush1.msra.mxu0 0.0
        %299 = vmatprep.subr.mxu0 0.0
        %300 = vmatpush1.msra.mxu0 0.0
        %301 = vmatprep.subr.mxu0 0.0
        %302 = vmatpush1.msra.mxu0 0.0
        %303 = vmatprep.subr.mxu0 0.0
        %304 = vmatpush1.msra.mxu0 0.0
        %305 = vmatprep.subr.mxu0 0.0
        %306 = vmatpush1.msra.mxu0 0.0
        %307 = vmatprep.subr.mxu0 0.0
        %308 = vmatpush1.msra.mxu0 0.0
        %309 = vmatprep.subr.mxu0 0.0
        %310 = vmatpush1.msra.mxu0 0.0
        %311 = vmatprep.subr.mxu0 0.0
        %312 = vmatpush1.msra.mxu0 0.0
        %313 = vmatprep.subr.mxu0 0.0
        %314 = vmatpush1.msra.mxu0 0.0
        %315 = vmatprep.subr.mxu0 0.0
        %316 = vmatpush1.msra.mxu0 0.0
        %317 = vmatprep.subr.mxu0 0.0
        %318 = vmatpush1.msra.mxu0 0.0
        %319 = vmatprep.subr.mxu0 0.0
        %320 = vmatpush1.msra.mxu0 0.0
        %321 = vmatprep.subr.mxu0 0.0
        %322 = vmatpush1.msra.mxu0 0.0
        %323 = vmatprep.subr.mxu0 0.0
        %324 = vmatpush1.msra.mxu0 0.0
        %325 = vmatprep.subr.mxu0 0.0
        %326 = vmatpush1.msra.mxu0 0.0
        %327 = vmatprep.subr.mxu0 0.0
        %328 = vmatpush1.msra.mxu0 0.0
        %329 = vmatprep.subr.mxu0 0.0
        %330 = vmatpush1.msra.mxu0 0.0
        %331 = vmatprep.subr.mxu0 0.0
        %332 = vmatpush1.msra.mxu0 0.0
        %333 = vmatprep.subr.mxu0 0.0
        %334 = vmatpush1.msra.mxu0 0.0
        %335 = vmatprep.subr.mxu0 0.0
        %336 = vmatpush1.msra.mxu0 0.0
        %337 = vmatprep.mubr.f32.mxu0 0.0
        %338 = vmatmul.mubr.f32.gmra.mrb[0].mxu0 %v268
        %v339 = vpop.f32.mrb[0].mxu0
        %v340 = vadd.f32 %v264, %v339
        %v341 = vpop.f32.mrb[0].mxu0
        %342 = vmatprep.mubr.f32.mxu0 0.0
        %343 = vmatmul.mubr.f32.gmra.mrb[0].mxu0 %v271
        %v344 = vpop.f32.mrb[0].mxu0
        %v345 = vadd.f32 %v264, %v344
        %v346 = vpop.f32.mrb[0].mxu0
        %347 = vdwg.mxu0
        %v348 = vld [vmem:[#allocation2] sm:$0x3]
        %v349 = vld [vmem:[#allocation3] sm:$0x3]
        %vm350 = vcmask 261120
        %v352 = vsel %vm350, %v348, 0
        %354 = vmatprep.subr.mxu0 0.0
        %355 = vmatpush1.msra.mxu0 %v253
        %356 = vmatprep.subr.mxu0 0.0
        %357 = vmatpush1.msra.mxu0 %v254
        %358 = vmatprep.subr.mxu0 0.0
        %359 = vmatpush1.msra.mxu0 %v255
        %360 = vmatprep.subr.mxu0 0.0
        %361 = vmatpush1.msra.mxu0 %v256
        %362 = vmatprep.subr.mxu0 0.0
        %363 = vmatpush1.msra.mxu0 0.0
        %364 = vmatprep.subr.mxu0 0.0
        %365 = vmatpush1.msra.mxu0 0.0
        %366 = vmatprep.subr.mxu0 0.0
        %367 = vmatpush1.msra.mxu0 0.0
        %368 = vmatprep.subr.mxu0 0.0
        %369 = vmatpush1.msra.mxu0 0.0
        %370 = vmatprep.subr.mxu0 0.0
        %371 = vmatpush1.msra.mxu0 0.0
        %372 = vmatprep.subr.mxu0 0.0
        %373 = vmatpush1.msra.mxu0 0.0
        %374 = vmatprep.subr.mxu0 0.0
        %375 = vmatpush1.msra.mxu0 0.0
        %376 = vmatprep.subr.mxu0 0.0
        %377 = vmatpush1.msra.mxu0 0.0
        %378 = vmatprep.subr.mxu0 0.0
        %379 = vmatpush1.msra.mxu0 0.0
        %380 = vmatprep.subr.mxu0 0.0
        %381 = vmatpush1.msra.mxu0 0.0
        %382 = vmatprep.subr.mxu0 0.0
        %383 = vmatpush1.msra.mxu0 0.0
        %384 = vmatprep.subr.mxu0 0.0
        %385 = vmatpush1.msra.mxu0 0.0
        %386 = vmatprep.subr.mxu0 0.0
        %387 = vmatpush1.msra.mxu0 0.0
        %388 = vmatprep.subr.mxu0 0.0
        %389 = vmatpush1.msra.mxu0 0.0
        %390 = vmatprep.subr.mxu0 0.0
        %391 = vmatpush1.msra.mxu0 0.0
        %392 = vmatprep.subr.mxu0 0.0
        %393 = vmatpush1.msra.mxu0 0.0
        %394 = vmatprep.subr.mxu0 0.0
        %395 = vmatpush1.msra.mxu0 0.0
        %396 = vmatprep.subr.mxu0 0.0
        %397 = vmatpush1.msra.mxu0 0.0
        %398 = vmatprep.subr.mxu0 0.0
        %399 = vmatpush1.msra.mxu0 0.0
        %400 = vmatprep.subr.mxu0 0.0
        %401 = vmatpush1.msra.mxu0 0.0
        %402 = vmatprep.subr.mxu0 0.0
        %403 = vmatpush1.msra.mxu0 0.0
        %404 = vmatprep.subr.mxu0 0.0
        %405 = vmatpush1.msra.mxu0 0.0
        %406 = vmatprep.subr.mxu0 0.0
        %407 = vmatpush1.msra.mxu0 0.0
        %408 = vmatprep.subr.mxu0 0.0
        %409 = vmatpush1.msra.mxu0 0.0
        %410 = vmatprep.subr.mxu0 0.0
        %411 = vmatpush1.msra.mxu0 0.0
        %412 = vmatprep.subr.mxu0 0.0
        %413 = vmatpush1.msra.mxu0 0.0
        %414 = vmatprep.subr.mxu0 0.0
        %415 = vmatpush1.msra.mxu0 0.0
        %416 = vmatprep.subr.mxu0 0.0
        %417 = vmatpush1.msra.mxu0 0.0
        %418 = vmatprep.mubr.f32.mxu0 0.0
        %419 = vmatmul.mubr.f32.gmra.mrb[0].mxu0 %v352
        %v420 = vpop.f32.mrb[0].mxu0
        %v421 = vadd.f32 0.0, %v420
        %v422 = vpop.f32.mrb[0].mxu0
        %423 = vdwg.mxu0
        %v425 = vrot.slane %v421, 1
        %v428 = vadd.f32 %v340, %v421
        %v429 = vadd.f32 %v345, %v425
        %v430 = vxor.u32 %v428, 2147483648
        %v431 = vxor.u32 %v429, 2147483648
        %v432 = vmul.f32 %v430, 1.442695
        %v433 = vpow.pop %v432
        %v434 = vmul.f32 %v431, 1.442695
        %v435 = vpow.pop %v434
        %v436 = vadd.f32 %v433, 1.0
        %v437 = vadd.f32 %v435, 1.0
        %v438 = vrcp.pop %v436
        %v439 = vmul.f32 1.0, %v438
        %v440 = vrcp.pop %v437
        %v441 = vmul.f32 1.0, %v440
        %v442 = vtanh.pop %v428
        %v443 = vtanh.pop %v429
        %v445 = vrot.slane %v349, 1
        %446 = vrot.lane.b32.xlu0 %v349, 32
        %v447 = vpop.permute.xlu0 %446
        %448 = vrot.lane.b32.xlu0 %v445, 32
        %v449 = vpop.permute.xlu0 %448
        %v452 = vmul.f32 %v439, %v447
        %v453 = vmul.f32 %v441, %v449
        %456 = vrot.lane.b32.xlu0 %v442, 64
        %v457 = vpop.permute.xlu0 %456
        %458 = vrot.lane.b32.xlu0 %v443, 64
        %v459 = vpop.permute.xlu0 %458
        %v462 = vmul.f32 %v439, %v457
        %v463 = vmul.f32 %v441, %v459
        %466 = vrot.lane.b32.xlu0 %v462, 32
        %v467 = vpop.permute.xlu0 %466
        %468 = vrot.lane.b32.xlu0 %v463, 32
        %v469 = vpop.permute.xlu0 %468
        %v472 = vadd.f32 %v452, %v467
        %v473 = vadd.f32 %v453, %v469
        %v474 = vtanh.pop %v472
        %v475 = vtanh.pop %v473
        %478 = vrot.lane.b32.xlu0 %v474, 64
        %v479 = vpop.permute.xlu0 %478
        %480 = vrot.lane.b32.xlu0 %v475, 64
        %v481 = vpop.permute.xlu0 %480
        %v484 = vmul.f32 %v439, %v479
        %v485 = vmul.f32 %v441, %v481
        %488 = vrot.lane.b32.xlu0 %v484, 32
        %v489 = vpop.permute.xlu0 %488
        %490 = vrot.lane.b32.xlu0 %v485, 32
        %v491 = vpop.permute.xlu0 %490
        %vm494 = vcmask 253952
        %495 = vst.msk [vmem:[%s243] sm:$0x1] %vm494, %v489
        %496 = vst.msk [vmem:[%s243 + $0x8] sm:$0x1] %vm494, %v491
        %v497 = vrot.slane %v485, 7
        %vm498 = vcmask 1041409
        %v499 = vsel %vm498, %v497, %v484
        %500 = vrot.lane.b32.xlu0 %v499, 32
        %v501 = vpop.permute.xlu0 %500
        %v502 = vsel %vm350, %v501, 0
        %504 = vmatprep.subr.mxu0 0.0
        %505 = vmatpush1.msra.mxu0 %v253
        %506 = vmatprep.subr.mxu0 0.0
        %507 = vmatpush1.msra.mxu0 %v254
        %508 = vmatprep.subr.mxu0 0.0
        %509 = vmatpush1.msra.mxu0 %v255
        %510 = vmatprep.subr.mxu0 0.0
        %511 = vmatpush1.msra.mxu0 %v256
        %512 = vmatprep.subr.mxu0 0.0
        %513 = vmatpush1.msra.mxu0 0.0
        %514 = vmatprep.subr.mxu0 0.0
        %515 = vmatpush1.msra.mxu0 0.0
        %516 = vmatprep.subr.mxu0 0.0
        %517 = vmatpush1.msra.mxu0 0.0
        %518 = vmatprep.subr.mxu0 0.0
        %519 = vmatpush1.msra.mxu0 0.0
        %520 = vmatprep.subr.mxu0 0.0
        %521 = vmatpush1.msra.mxu0 0.0
        %522 = vmatprep.subr.mxu0 0.0
        %523 = vmatpush1.msra.mxu0 0.0
        %524 = vmatprep.subr.mxu0 0.0
        %525 = vmatpush1.msra.mxu0 0.0
        %526 = vmatprep.subr.mxu0 0.0
        %527 = vmatpush1.msra.mxu0 0.0
        %528 = vmatprep.subr.mxu0 0.0
        %529 = vmatpush1.msra.mxu0 0.0
        %530 = vmatprep.subr.mxu0 0.0
        %531 = vmatpush1.msra.mxu0 0.0
        %532 = vmatprep.subr.mxu0 0.0
        %533 = vmatpush1.msra.mxu0 0.0
        %534 = vmatprep.subr.mxu0 0.0
        %535 = vmatpush1.msra.mxu0 0.0
        %536 = vmatprep.subr.mxu0 0.0
        %537 = vmatpush1.msra.mxu0 0.0
        %538 = vmatprep.subr.mxu0 0.0
        %539 = vmatpush1.msra.mxu0 0.0
        %540 = vmatprep.subr.mxu0 0.0
        %541 = vmatpush1.msra.mxu0 0.0
        %542 = vmatprep.subr.mxu0 0.0
        %543 = vmatpush1.msra.mxu0 0.0
        %544 = vmatprep.subr.mxu0 0.0
        %545 = vmatpush1.msra.mxu0 0.0
        %546 = vmatprep.subr.mxu0 0.0
        %547 = vmatpush1.msra.mxu0 0.0
        %548 = vmatprep.subr.mxu0 0.0
        %549 = vmatpush1.msra.mxu0 0.0
        %550 = vmatprep.subr.mxu0 0.0
        %551 = vmatpush1.msra.mxu0 0.0
        %552 = vmatprep.subr.mxu0 0.0
        %553 = vmatpush1.msra.mxu0 0.0
        %554 = vmatprep.subr.mxu0 0.0
        %555 = vmatpush1.msra.mxu0 0.0
        %556 = vmatprep.subr.mxu0 0.0
        %557 = vmatpush1.msra.mxu0 0.0
        %558 = vmatprep.subr.mxu0 0.0
        %559 = vmatpush1.msra.mxu0 0.0
        %560 = vmatprep.subr.mxu0 0.0
        %561 = vmatpush1.msra.mxu0 0.0
        %562 = vmatprep.subr.mxu0 0.0
        %563 = vmatpush1.msra.mxu0 0.0
        %564 = vmatprep.subr.mxu0 0.0
        %565 = vmatpush1.msra.mxu0 0.0
        %566 = vmatprep.subr.mxu0 0.0
        %567 = vmatpush1.msra.mxu0 0.0
        %568 = vmatprep.mubr.f32.mxu0 0.0
        %569 = vmatmul.mubr.f32.gmra.mrb[0].mxu0 %v502
        %v570 = vpop.f32.mrb[0].mxu0
        %v571 = vadd.f32 0.0, %v570
        %v572 = vpop.f32.mrb[0].mxu0
        %573 = vdwg.mxu0
        %v575 = vrot.slane %v571, 7
        %v578 = vadd.f32 %v340, %v575
        %v579 = vadd.f32 %v345, %v571
        %v580 = vxor.u32 %v578, 2147483648
        %v581 = vxor.u32 %v579, 2147483648
        %v582 = vmul.f32 %v580, 1.442695
        %v583 = vpow.pop %v582
        %v584 = vmul.f32 %v581, 1.442695
        %v585 = vpow.pop %v584
        %v586 = vadd.f32 %v583, 1.0
        %v587 = vadd.f32 %v585, 1.0
        %v588 = vrcp.pop %v586
        %v589 = vmul.f32 1.0, %v588
        %v590 = vrcp.pop %v587
        %v591 = vmul.f32 1.0, %v590
        %v592 = vtanh.pop %v578
        %v593 = vtanh.pop %v579
        %v596 = vrot.slane %v472, 7
        %v597 = vrot.slane %v473, 7
        %v600 = vmul.f32 %v589, %v596
        %v601 = vmul.f32 %v591, %v597
        %604 = vrot.lane.b32.xlu0 %v592, 64
        %v605 = vpop.permute.xlu0 %604
        %606 = vrot.lane.b32.xlu0 %v593, 64
        %v607 = vpop.permute.xlu0 %606
        %v610 = vmul.f32 %v589, %v605
        %v611 = vmul.f32 %v591, %v607
        %614 = vrot.lane.b32.xlu0 %v610, 32
        %v615 = vpop.permute.xlu0 %614
        %616 = vrot.lane.b32.xlu0 %v611, 32
        %v617 = vpop.permute.xlu0 %616
        %v620 = vadd.f32 %v600, %v615
        %v621 = vadd.f32 %v601, %v617
        %v622 = vtanh.pop %v620
        %v623 = vtanh.pop %v621
        %626 = vrot.lane.b32.xlu0 %v622, 64
        %v627 = vpop.permute.xlu0 %626
        %628 = vrot.lane.b32.xlu0 %v623, 64
        %v629 = vpop.permute.xlu0 %628
        %v632 = vmul.f32 %v589, %v627
        %v633 = vmul.f32 %v591, %v629
        %636 = vrot.lane.b32.xlu0 %v632, 32
        %v637 = vpop.permute.xlu0 %636
        %638 = vrot.lane.b32.xlu0 %v633, 32
        %v639 = vpop.permute.xlu0 %638
        %vm642 = vcmask 254977
        %643 = vst.msk [vmem:[%s243] sm:$0x2] %vm642, %v637
        %644 = vst.msk [vmem:[%s243 + $0x8] sm:$0x2] %vm642, %v639
        %v645 = vrot.slane %v632, 1
        %v646 = vsel %vm498, %v633, %v645
        %647 = vrot.lane.b32.xlu0 %v646, 32
        %v648 = vpop.permute.xlu0 %647
        %v649 = vsel %vm350, %v648, 0
        %651 = vmatprep.subr.mxu0 0.0
        %652 = vmatpush1.msra.mxu0 %v253
        %653 = vmatprep.subr.mxu0 0.0
        %654 = vmatpush1.msra.mxu0 %v254
        %655 = vmatprep.subr.mxu0 0.0
        %656 = vmatpush1.msra.mxu0 %v255
        %657 = vmatprep.subr.mxu0 0.0
        %658 = vmatpush1.msra.mxu0 %v256
        %659 = vmatprep.subr.mxu0 0.0
        %660 = vmatpush1.msra.mxu0 0.0
        %661 = vmatprep.subr.mxu0 0.0
        %662 = vmatpush1.msra.mxu0 0.0
        %663 = vmatprep.subr.mxu0 0.0
        %664 = vmatpush1.msra.mxu0 0.0
        %665 = vmatprep.subr.mxu0 0.0
        %666 = vmatpush1.msra.mxu0 0.0
        %667 = vmatprep.subr.mxu0 0.0
        %668 = vmatpush1.msra.mxu0 0.0
        %669 = vmatprep.subr.mxu0 0.0
        %670 = vmatpush1.msra.mxu0 0.0
        %671 = vmatprep.subr.mxu0 0.0
        %672 = vmatpush1.msra.mxu0 0.0
        %673 = vmatprep.subr.mxu0 0.0
        %674 = vmatpush1.msra.mxu0 0.0
        %675 = vmatprep.subr.mxu0 0.0
        %676 = vmatpush1.msra.mxu0 0.0
        %677 = vmatprep.subr.mxu0 0.0
        %678 = vmatpush1.msra.mxu0 0.0
        %679 = vmatprep.subr.mxu0 0.0
        %680 = vmatpush1.msra.mxu0 0.0
        %681 = vmatprep.subr.mxu0 0.0
        %682 = vmatpush1.msra.mxu0 0.0
        %683 = vmatprep.subr.mxu0 0.0
        %684 = vmatpush1.msra.mxu0 0.0
        %685 = vmatprep.subr.mxu0 0.0
        %686 = vmatpush1.msra.mxu0 0.0
        %687 = vmatprep.subr.mxu0 0.0
        %688 = vmatpush1.msra.mxu0 0.0
        %689 = vmatprep.subr.mxu0 0.0
        %690 = vmatpush1.msra.mxu0 0.0
        %691 = vmatprep.subr.mxu0 0.0
        %692 = vmatpush1.msra.mxu0 0.0
        %693 = vmatprep.subr.mxu0 0.0
        %694 = vmatpush1.msra.mxu0 0.0
        %695 = vmatprep.subr.mxu0 0.0
        %696 = vmatpush1.msra.mxu0 0.0
        %697 = vmatprep.subr.mxu0 0.0
        %698 = vmatpush1.msra.mxu0 0.0
        %699 = vmatprep.subr.mxu0 0.0
        %700 = vmatpush1.msra.mxu0 0.0
        %701 = vmatprep.subr.mxu0 0.0
        %702 = vmatpush1.msra.mxu0 0.0
        %703 = vmatprep.subr.mxu0 0.0
        %704 = vmatpush1.msra.mxu0 0.0
        %705 = vmatprep.subr.mxu0 0.0
        %706 = vmatpush1.msra.mxu0 0.0
        %707 = vmatprep.subr.mxu0 0.0
        %708 = vmatpush1.msra.mxu0 0.0
        %709 = vmatprep.subr.mxu0 0.0
        %710 = vmatpush1.msra.mxu0 0.0
        %711 = vmatprep.subr.mxu0 0.0
        %712 = vmatpush1.msra.mxu0 0.0
        %713 = vmatprep.subr.mxu0 0.0
        %714 = vmatpush1.msra.mxu0 0.0
        %715 = vmatprep.mubr.f32.mxu0 0.0
        %716 = vmatmul.mubr.f32.gmra.mrb[0].mxu0 %v649
        %v717 = vpop.f32.mrb[0].mxu0
        %v718 = vadd.f32 0.0, %v717
        %v719 = vpop.f32.mrb[0].mxu0
        %720 = vdwg.mxu0
        %v722 = vrot.slane %v718, 6
        %v723 = vrot.slane %v718, 7
        %v726 = vadd.f32 %v340, %v722
        %v727 = vadd.f32 %v345, %v723
        %v728 = vxor.u32 %v726, 2147483648
        %v729 = vxor.u32 %v727, 2147483648
        %v730 = vmul.f32 %v728, 1.442695
        %v731 = vpow.pop %v730
        %v732 = vmul.f32 %v729, 1.442695
        %v733 = vpow.pop %v732
        %v734 = vadd.f32 %v731, 1.0
        %v735 = vadd.f32 %v733, 1.0
        %v736 = vrcp.pop %v734
        %v737 = vmul.f32 1.0, %v736
        %v738 = vrcp.pop %v735
        %v739 = vmul.f32 1.0, %v738
        %v740 = vtanh.pop %v726
        %v741 = vtanh.pop %v727
        %v744 = vrot.slane %v620, 7
        %v745 = vrot.slane %v621, 7
        %v748 = vmul.f32 %v737, %v744
        %v749 = vmul.f32 %v739, %v745
        %752 = vrot.lane.b32.xlu0 %v740, 64
        %v753 = vpop.permute.xlu0 %752
        %754 = vrot.lane.b32.xlu0 %v741, 64
        %v755 = vpop.permute.xlu0 %754
        %v758 = vmul.f32 %v737, %v753
        %v759 = vmul.f32 %v739, %v755
        %762 = vrot.lane.b32.xlu0 %v758, 32
        %v763 = vpop.permute.xlu0 %762
        %764 = vrot.lane.b32.xlu0 %v759, 32
        %v765 = vpop.permute.xlu0 %764
        %v768 = vadd.f32 %v748, %v763
        %v769 = vadd.f32 %v749, %v765
        %v770 = vtanh.pop %v768
        %v771 = vtanh.pop %v769
        %774 = vrot.lane.b32.xlu0 %v770, 64
        %v775 = vpop.permute.xlu0 %774
        %776 = vrot.lane.b32.xlu0 %v771, 64
        %v777 = vpop.permute.xlu0 %776
        %v780 = vmul.f32 %v737, %v775
        %v781 = vmul.f32 %v739, %v777
        %784 = vrot.lane.b32.xlu0 %v780, 32
        %v785 = vpop.permute.xlu0 %784
        %786 = vrot.lane.b32.xlu0 %v781, 32
        %v787 = vpop.permute.xlu0 %786
        %vm790 = vcmask 256002
        %791 = vst.msk [vmem:[%s243] sm:$0x4] %vm790, %v785
        %792 = vst.msk [vmem:[%s243 + $0x8] sm:$0x4] %vm790, %v787
        %v793 = vrot.slane %v780, 2
        %v794 = vrot.slane %v781, 1
        %v795 = vsel %vm498, %v794, %v793
        %796 = vrot.lane.b32.xlu0 %v795, 32
        %v797 = vpop.permute.xlu0 %796
        %v798 = vsel %vm350, %v797, 0
        %800 = vmatprep.subr.mxu0 0.0
        %801 = vmatpush1.msra.mxu0 %v253
        %802 = vmatprep.subr.mxu0 0.0
        %803 = vmatpush1.msra.mxu0 %v254
        %804 = vmatprep.subr.mxu0 0.0
        %805 = vmatpush1.msra.mxu0 %v255
        %806 = vmatprep.subr.mxu0 0.0
        %807 = vmatpush1.msra.mxu0 %v256
        %808 = vmatprep.subr.mxu0 0.0
        %809 = vmatpush1.msra.mxu0 0.0
        %810 = vmatprep.subr.mxu0 0.0
        %811 = vmatpush1.msra.mxu0 0.0
        %812 = vmatprep.subr.mxu0 0.0
        %813 = vmatpush1.msra.mxu0 0.0
        %814 = vmatprep.subr.mxu0 0.0
        %815 = vmatpush1.msra.mxu0 0.0
        %816 = vmatprep.subr.mxu0 0.0
        %817 = vmatpush1.msra.mxu0 0.0
        %818 = vmatprep.subr.mxu0 0.0
        %819 = vmatpush1.msra.mxu0 0.0
        %820 = vmatprep.subr.mxu0 0.0
        %821 = vmatpush1.msra.mxu0 0.0
        %822 = vmatprep.subr.mxu0 0.0
        %823 = vmatpush1.msra.mxu0 0.0
        %824 = vmatprep.subr.mxu0 0.0
        %825 = vmatpush1.msra.mxu0 0.0
        %826 = vmatprep.subr.mxu0 0.0
        %827 = vmatpush1.msra.mxu0 0.0
        %828 = vmatprep.subr.mxu0 0.0
        %829 = vmatpush1.msra.mxu0 0.0
        %830 = vmatprep.subr.mxu0 0.0
        %831 = vmatpush1.msra.mxu0 0.0
        %832 = vmatprep.subr.mxu0 0.0
        %833 = vmatpush1.msra.mxu0 0.0
        %834 = vmatprep.subr.mxu0 0.0
        %835 = vmatpush1.msra.mxu0 0.0
        %836 = vmatprep.subr.mxu0 0.0
        %837 = vmatpush1.msra.mxu0 0.0
        %838 = vmatprep.subr.mxu0 0.0
        %839 = vmatpush1.msra.mxu0 0.0
        %840 = vmatprep.subr.mxu0 0.0
        %841 = vmatpush1.msra.mxu0 0.0
        %842 = vmatprep.subr.mxu0 0.0
        %843 = vmatpush1.msra.mxu0 0.0
        %844 = vmatprep.subr.mxu0 0.0
        %845 = vmatpush1.msra.mxu0 0.0
        %846 = vmatprep.subr.mxu0 0.0
        %847 = vmatpush1.msra.mxu0 0.0
        %848 = vmatprep.subr.mxu0 0.0
        %849 = vmatpush1.msra.mxu0 0.0
        %850 = vmatprep.subr.mxu0 0.0
        %851 = vmatpush1.msra.mxu0 0.0
        %852 = vmatprep.subr.mxu0 0.0
        %853 = vmatpush1.msra.mxu0 0.0
        %854 = vmatprep.subr.mxu0 0.0
        %855 = vmatpush1.msra.mxu0 0.0
        %856 = vmatprep.subr.mxu0 0.0
        %857 = vmatpush1.msra.mxu0 0.0
        %858 = vmatprep.subr.mxu0 0.0
        %859 = vmatpush1.msra.mxu0 0.0
        %860 = vmatprep.subr.mxu0 0.0
        %861 = vmatpush1.msra.mxu0 0.0
        %862 = vmatprep.subr.mxu0 0.0
        %863 = vmatpush1.msra.mxu0 0.0
        %864 = vmatprep.mubr.f32.mxu0 0.0
        %865 = vmatmul.mubr.f32.gmra.mrb[0].mxu0 %v798
        %v866 = vpop.f32.mrb[0].mxu0
        %v867 = vadd.f32 0.0, %v866
        %v868 = vpop.f32.mrb[0].mxu0
        %869 = vdwg.mxu0
        %v871 = vrot.slane %v867, 5
        %v872 = vrot.slane %v867, 6
        %v875 = vadd.f32 %v340, %v871
        %v876 = vadd.f32 %v345, %v872
        %v877 = vxor.u32 %v875, 2147483648
        %v878 = vxor.u32 %v876, 2147483648
        %v879 = vmul.f32 %v877, 1.442695
        %v880 = vpow.pop %v879
        %v881 = vmul.f32 %v878, 1.442695
        %v882 = vpow.pop %v881
        %v883 = vadd.f32 %v880, 1.0
        %v884 = vadd.f32 %v882, 1.0
        %v885 = vrcp.pop %v883
        %v886 = vmul.f32 1.0, %v885
        %v887 = vrcp.pop %v884
        %v888 = vmul.f32 1.0, %v887
        %v889 = vtanh.pop %v875
        %v890 = vtanh.pop %v876
        %v893 = vrot.slane %v768, 7
        %v894 = vrot.slane %v769, 7
        %v897 = vmul.f32 %v886, %v893
        %v898 = vmul.f32 %v888, %v894
        %901 = vrot.lane.b32.xlu0 %v889, 64
        %v902 = vpop.permute.xlu0 %901
        %903 = vrot.lane.b32.xlu0 %v890, 64
        %v904 = vpop.permute.xlu0 %903
        %v907 = vmul.f32 %v886, %v902
        %v908 = vmul.f32 %v888, %v904
        %911 = vrot.lane.b32.xlu0 %v907, 32
        %v912 = vpop.permute.xlu0 %911
        %913 = vrot.lane.b32.xlu0 %v908, 32
        %v914 = vpop.permute.xlu0 %913
        %v917 = vadd.f32 %v897, %v912
        %v918 = vadd.f32 %v898, %v914
        %v919 = vtanh.pop %v917
        %v920 = vtanh.pop %v918
        %923 = vrot.lane.b32.xlu0 %v919, 64
        %v924 = vpop.permute.xlu0 %923
        %925 = vrot.lane.b32.xlu0 %v920, 64
        %v926 = vpop.permute.xlu0 %925
        %v929 = vmul.f32 %v886, %v924
        %v930 = vmul.f32 %v888, %v926
        %933 = vrot.lane.b32.xlu0 %v929, 32
        %v934 = vpop.permute.xlu0 %933
        %935 = vrot.lane.b32.xlu0 %v930, 32
        %v936 = vpop.permute.xlu0 %935
        %vm939 = vcmask 257027
        %940 = vst.msk [vmem:[%s243] sm:$0x8] %vm939, %v934
        %941 = vst.msk [vmem:[%s243 + $0x8] sm:$0x8] %vm939, %v936
        %v942 = vrot.slane %v929, 3
        %v943 = vrot.slane %v930, 2
        %v944 = vsel %vm498, %v943, %v942
        %945 = vrot.lane.b32.xlu0 %v944, 32
        %v946 = vpop.permute.xlu0 %945
        %v947 = vsel %vm350, %v946, 0
        %949 = vmatprep.subr.mxu0 0.0
        %950 = vmatpush1.msra.mxu0 %v253
        %951 = vmatprep.subr.mxu0 0.0
        %952 = vmatpush1.msra.mxu0 %v254
        %953 = vmatprep.subr.mxu0 0.0
        %954 = vmatpush1.msra.mxu0 %v255
        %955 = vmatprep.subr.mxu0 0.0
        %956 = vmatpush1.msra.mxu0 %v256
        %957 = vmatprep.subr.mxu0 0.0
        %958 = vmatpush1.msra.mxu0 0.0
        %959 = vmatprep.subr.mxu0 0.0
        %960 = vmatpush1.msra.mxu0 0.0
        %961 = vmatprep.subr.mxu0 0.0
        %962 = vmatpush1.msra.mxu0 0.0
        %963 = vmatprep.subr.mxu0 0.0
        %964 = vmatpush1.msra.mxu0 0.0
        %965 = vmatprep.subr.mxu0 0.0
        %966 = vmatpush1.msra.mxu0 0.0
        %967 = vmatprep.subr.mxu0 0.0
        %968 = vmatpush1.msra.mxu0 0.0
        %969 = vmatprep.subr.mxu0 0.0
        %970 = vmatpush1.msra.mxu0 0.0
        %971 = vmatprep.subr.mxu0 0.0
        %972 = vmatpush1.msra.mxu0 0.0
        %973 = vmatprep.subr.mxu0 0.0
        %974 = vmatpush1.msra.mxu0 0.0
        %975 = vmatprep.subr.mxu0 0.0
        %976 = vmatpush1.msra.mxu0 0.0
        %977 = vmatprep.subr.mxu0 0.0
        %978 = vmatpush1.msra.mxu0 0.0
        %979 = vmatprep.subr.mxu0 0.0
        %980 = vmatpush1.msra.mxu0 0.0
        %981 = vmatprep.subr.mxu0 0.0
        %982 = vmatpush1.msra.mxu0 0.0
        %983 = vmatprep.subr.mxu0 0.0
        %984 = vmatpush1.msra.mxu0 0.0
        %985 = vmatprep.subr.mxu0 0.0
        %986 = vmatpush1.msra.mxu0 0.0
        %987 = vmatprep.subr.mxu0 0.0
        %988 = vmatpush1.msra.mxu0 0.0
        %989 = vmatprep.subr.mxu0 0.0
        %990 = vmatpush1.msra.mxu0 0.0
        %991 = vmatprep.subr.mxu0 0.0
        %992 = vmatpush1.msra.mxu0 0.0
        %993 = vmatprep.subr.mxu0 0.0
        %994 = vmatpush1.msra.mxu0 0.0
        %995 = vmatprep.subr.mxu0 0.0
        %996 = vmatpush1.msra.mxu0 0.0
        %997 = vmatprep.subr.mxu0 0.0
        %998 = vmatpush1.msra.mxu0 0.0
        %999 = vmatprep.subr.mxu0 0.0
        %1000 = vmatpush1.msra.mxu0 0.0
        %1001 = vmatprep.subr.mxu0 0.0
        %1002 = vmatpush1.msra.mxu0 0.0
        %1003 = vmatprep.subr.mxu0 0.0
        %1004 = vmatpush1.msra.mxu0 0.0
        %1005 = vmatprep.subr.mxu0 0.0
        %1006 = vmatpush1.msra.mxu0 0.0
        %1007 = vmatprep.subr.mxu0 0.0
        %1008 = vmatpush1.msra.mxu0 0.0
        %1009 = vmatprep.subr.mxu0 0.0
        %1010 = vmatpush1.msra.mxu0 0.0
        %1011 = vmatprep.subr.mxu0 0.0
        %1012 = vmatpush1.msra.mxu0 0.0
        %1013 = vmatprep.mubr.f32.mxu0 0.0
        %1014 = vmatmul.mubr.f32.gmra.mrb[0].mxu0 %v947
        %v1015 = vpop.f32.mrb[0].mxu0
        %v1016 = vadd.f32 0.0, %v1015
        %v1017 = vpop.f32.mrb[0].mxu0
        %1018 = vdwg.mxu0
        %v1020 = vrot.slane %v1016, 4
        %v1021 = vrot.slane %v1016, 5
        %v1024 = vadd.f32 %v340, %v1020
        %v1025 = vadd.f32 %v345, %v1021
        %v1026 = vxor.u32 %v1024, 2147483648
        %v1027 = vxor.u32 %v1025, 2147483648
        %v1028 = vmul.f32 %v1026, 1.442695
        %v1029 = vpow.pop %v1028
        %v1030 = vmul.f32 %v1027, 1.442695
        %v1031 = vpow.pop %v1030
        %v1032 = vadd.f32 %v1029, 1.0
        %v1033 = vadd.f32 %v1031, 1.0
        %v1034 = vrcp.pop %v1032
        %v1035 = vmul.f32 1.0, %v1034
        %v1036 = vrcp.pop %v1033
        %v1037 = vmul.f32 1.0, %v1036
        %v1038 = vtanh.pop %v1024
        %v1039 = vtanh.pop %v1025
        %v1042 = vrot.slane %v917, 7
        %v1043 = vrot.slane %v918, 7
        %v1046 = vmul.f32 %v1035, %v1042
        %v1047 = vmul.f32 %v1037, %v1043
        %1050 = vrot.lane.b32.xlu0 %v1038, 64
        %v1051 = vpop.permute.xlu0 %1050
        %1052 = vrot.lane.b32.xlu0 %v1039, 64
        %v1053 = vpop.permute.xlu0 %1052
        %v1056 = vmul.f32 %v1035, %v1051
        %v1057 = vmul.f32 %v1037, %v1053
        %1060 = vrot.lane.b32.xlu0 %v1056, 32
        %v1061 = vpop.permute.xlu0 %1060
        %1062 = vrot.lane.b32.xlu0 %v1057, 32
        %v1063 = vpop.permute.xlu0 %1062
        %v1066 = vadd.f32 %v1046, %v1061
        %v1067 = vadd.f32 %v1047, %v1063
        %v1068 = vtanh.pop %v1066
        %v1069 = vtanh.pop %v1067
        %1072 = vrot.lane.b32.xlu0 %v1068, 64
        %v1073 = vpop.permute.xlu0 %1072
        %1074 = vrot.lane.b32.xlu0 %v1069, 64
        %v1075 = vpop.permute.xlu0 %1074
        %v1078 = vmul.f32 %v1035, %v1073
        %v1079 = vmul.f32 %v1037, %v1075
        %1082 = vrot.lane.b32.xlu0 %v1078, 32
        %v1083 = vpop.permute.xlu0 %1082
        %1084 = vrot.lane.b32.xlu0 %v1079, 32
        %v1085 = vpop.permute.xlu0 %1084
        %vm1088 = vcmask 258052
        %1089 = vst.msk [vmem:[%s243] sm:$0x10] %vm1088, %v1083
        %1090 = vst.msk [vmem:[%s243 + $0x8] sm:$0x10] %vm1088, %v1085
        %v1091 = vrot.slane %v1078, 4
        %v1092 = vrot.slane %v1079, 3
        %v1093 = vsel %vm498, %v1092, %v1091
        %1094 = vrot.lane.b32.xlu0 %v1093, 32
        %v1095 = vpop.permute.xlu0 %1094
        %v1096 = vsel %vm350, %v1095, 0
        %1098 = vmatprep.subr.mxu0 0.0
        %1099 = vmatpush1.msra.mxu0 %v253
        %1100 = vmatprep.subr.mxu0 0.0
        %1101 = vmatpush1.msra.mxu0 %v254
        %1102 = vmatprep.subr.mxu0 0.0
        %1103 = vmatpush1.msra.mxu0 %v255
        %1104 = vmatprep.subr.mxu0 0.0
        %1105 = vmatpush1.msra.mxu0 %v256
        %1106 = vmatprep.subr.mxu0 0.0
        %1107 = vmatpush1.msra.mxu0 0.0
        %1108 = vmatprep.subr.mxu0 0.0
        %1109 = vmatpush1.msra.mxu0 0.0
        %1110 = vmatprep.subr.mxu0 0.0
        %1111 = vmatpush1.msra.mxu0 0.0
        %1112 = vmatprep.subr.mxu0 0.0
        %1113 = vmatpush1.msra.mxu0 0.0
        %1114 = vmatprep.subr.mxu0 0.0
        %1115 = vmatpush1.msra.mxu0 0.0
        %1116 = vmatprep.subr.mxu0 0.0
        %1117 = vmatpush1.msra.mxu0 0.0
        %1118 = vmatprep.subr.mxu0 0.0
        %1119 = vmatpush1.msra.mxu0 0.0
        %1120 = vmatprep.subr.mxu0 0.0
        %1121 = vmatpush1.msra.mxu0 0.0
        %1122 = vmatprep.subr.mxu0 0.0
        %1123 = vmatpush1.msra.mxu0 0.0
        %1124 = vmatprep.subr.mxu0 0.0
        %1125 = vmatpush1.msra.mxu0 0.0
        %1126 = vmatprep.subr.mxu0 0.0
        %1127 = vmatpush1.msra.mxu0 0.0
        %1128 = vmatprep.subr.mxu0 0.0
        %1129 = vmatpush1.msra.mxu0 0.0
        %1130 = vmatprep.subr.mxu0 0.0
        %1131 = vmatpush1.msra.mxu0 0.0
        %1132 = vmatprep.subr.mxu0 0.0
        %1133 = vmatpush1.msra.mxu0 0.0
        %1134 = vmatprep.subr.mxu0 0.0
        %1135 = vmatpush1.msra.mxu0 0.0
        %1136 = vmatprep.subr.mxu0 0.0
        %1137 = vmatpush1.msra.mxu0 0.0
        %1138 = vmatprep.subr.mxu0 0.0
        %1139 = vmatpush1.msra.mxu0 0.0
        %1140 = vmatprep.subr.mxu0 0.0
        %1141 = vmatpush1.msra.mxu0 0.0
        %1142 = vmatprep.subr.mxu0 0.0
        %1143 = vmatpush1.msra.mxu0 0.0
        %1144 = vmatprep.subr.mxu0 0.0
        %1145 = vmatpush1.msra.mxu0 0.0
        %1146 = vmatprep.subr.mxu0 0.0
        %1147 = vmatpush1.msra.mxu0 0.0
        %1148 = vmatprep.subr.mxu0 0.0
        %1149 = vmatpush1.msra.mxu0 0.0
        %1150 = vmatprep.subr.mxu0 0.0
        %1151 = vmatpush1.msra.mxu0 0.0
        %1152 = vmatprep.subr.mxu0 0.0
        %1153 = vmatpush1.msra.mxu0 0.0
        %1154 = vmatprep.subr.mxu0 0.0
        %1155 = vmatpush1.msra.mxu0 0.0
        %1156 = vmatprep.subr.mxu0 0.0
        %1157 = vmatpush1.msra.mxu0 0.0
        %1158 = vmatprep.subr.mxu0 0.0
        %1159 = vmatpush1.msra.mxu0 0.0
        %1160 = vmatprep.subr.mxu0 0.0
        %1161 = vmatpush1.msra.mxu0 0.0
        %1162 = vmatprep.mubr.f32.mxu0 0.0
        %1163 = vmatmul.mubr.f32.gmra.mrb[0].mxu0 %v1096
        %v1164 = vpop.f32.mrb[0].mxu0
        %v1165 = vadd.f32 0.0, %v1164
        %v1166 = vpop.f32.mrb[0].mxu0
        %1167 = vdwg.mxu0
        %v1169 = vrot.slane %v1165, 3
        %v1170 = vrot.slane %v1165, 4
        %v1173 = vadd.f32 %v340, %v1169
        %v1174 = vadd.f32 %v345, %v1170
        %v1175 = vxor.u32 %v1173, 2147483648
        %v1176 = vxor.u32 %v1174, 2147483648
        %v1177 = vmul.f32 %v1175, 1.442695
        %v1178 = vpow.pop %v1177
        %v1179 = vmul.f32 %v1176, 1.442695
        %v1180 = vpow.pop %v1179
        %v1181 = vadd.f32 %v1178, 1.0
        %v1182 = vadd.f32 %v1180, 1.0
        %v1183 = vrcp.pop %v1181
        %v1184 = vmul.f32 1.0, %v1183
        %v1185 = vrcp.pop %v1182
        %v1186 = vmul.f32 1.0, %v1185
        %v1187 = vtanh.pop %v1173
        %v1188 = vtanh.pop %v1174
        %v1191 = vrot.slane %v1066, 7
        %v1192 = vrot.slane %v1067, 7
        %v1195 = vmul.f32 %v1184, %v1191
        %v1196 = vmul.f32 %v1186, %v1192
        %1199 = vrot.lane.b32.xlu0 %v1187, 64
        %v1200 = vpop.permute.xlu0 %1199
        %1201 = vrot.lane.b32.xlu0 %v1188, 64
        %v1202 = vpop.permute.xlu0 %1201
        %v1205 = vmul.f32 %v1184, %v1200
        %v1206 = vmul.f32 %v1186, %v1202
        %1209 = vrot.lane.b32.xlu0 %v1205, 32
        %v1210 = vpop.permute.xlu0 %1209
        %1211 = vrot.lane.b32.xlu0 %v1206, 32
        %v1212 = vpop.permute.xlu0 %1211
        %v1215 = vadd.f32 %v1195, %v1210
        %v1216 = vadd.f32 %v1196, %v1212
        %v1217 = vtanh.pop %v1215
        %v1218 = vtanh.pop %v1216
        %1221 = vrot.lane.b32.xlu0 %v1217, 64
        %v1222 = vpop.permute.xlu0 %1221
        %1223 = vrot.lane.b32.xlu0 %v1218, 64
        %v1224 = vpop.permute.xlu0 %1223
        %v1227 = vmul.f32 %v1184, %v1222
        %v1228 = vmul.f32 %v1186, %v1224
        %1231 = vrot.lane.b32.xlu0 %v1227, 32
        %v1232 = vpop.permute.xlu0 %1231
        %1233 = vrot.lane.b32.xlu0 %v1228, 32
        %v1234 = vpop.permute.xlu0 %1233
        %vm1237 = vcmask 259077
        %1238 = vst.msk [vmem:[%s243] sm:$0x20] %vm1237, %v1232
        %1239 = vst.msk [vmem:[%s243 + $0x8] sm:$0x20] %vm1237, %v1234
        %v1240 = vrot.slane %v1227, 5
        %v1241 = vrot.slane %v1228, 4
        %v1242 = vsel %vm498, %v1241, %v1240
        %1243 = vrot.lane.b32.xlu0 %v1242, 32
        %v1244 = vpop.permute.xlu0 %1243
        %v1245 = vsel %vm350, %v1244, 0
        %1247 = vmatprep.subr.mxu0 0.0
        %1248 = vmatpush1.msra.mxu0 %v253
        %1249 = vmatprep.subr.mxu0 0.0
        %1250 = vmatpush1.msra.mxu0 %v254
        %1251 = vmatprep.subr.mxu0 0.0
        %1252 = vmatpush1.msra.mxu0 %v255
        %1253 = vmatprep.subr.mxu0 0.0
        %1254 = vmatpush1.msra.mxu0 %v256
        %1255 = vmatprep.subr.mxu0 0.0
        %1256 = vmatpush1.msra.mxu0 0.0
        %1257 = vmatprep.subr.mxu0 0.0
        %1258 = vmatpush1.msra.mxu0 0.0
        %1259 = vmatprep.subr.mxu0 0.0
        %1260 = vmatpush1.msra.mxu0 0.0
        %1261 = vmatprep.subr.mxu0 0.0
        %1262 = vmatpush1.msra.mxu0 0.0
        %1263 = vmatprep.subr.mxu0 0.0
        %1264 = vmatpush1.msra.mxu0 0.0
        %1265 = vmatprep.subr.mxu0 0.0
        %1266 = vmatpush1.msra.mxu0 0.0
        %1267 = vmatprep.subr.mxu0 0.0
        %1268 = vmatpush1.msra.mxu0 0.0
        %1269 = vmatprep.subr.mxu0 0.0
        %1270 = vmatpush1.msra.mxu0 0.0
        %1271 = vmatprep.subr.mxu0 0.0
        %1272 = vmatpush1.msra.mxu0 0.0
        %1273 = vmatprep.subr.mxu0 0.0
        %1274 = vmatpush1.msra.mxu0 0.0
        %1275 = vmatprep.subr.mxu0 0.0
        %1276 = vmatpush1.msra.mxu0 0.0
        %1277 = vmatprep.subr.mxu0 0.0
        %1278 = vmatpush1.msra.mxu0 0.0
        %1279 = vmatprep.subr.mxu0 0.0
        %1280 = vmatpush1.msra.mxu0 0.0
        %1281 = vmatprep.subr.mxu0 0.0
        %1282 = vmatpush1.msra.mxu0 0.0
        %1283 = vmatprep.subr.mxu0 0.0
        %1284 = vmatpush1.msra.mxu0 0.0
        %1285 = vmatprep.subr.mxu0 0.0
        %1286 = vmatpush1.msra.mxu0 0.0
        %1287 = vmatprep.subr.mxu0 0.0
        %1288 = vmatpush1.msra.mxu0 0.0
        %1289 = vmatprep.subr.mxu0 0.0
        %1290 = vmatpush1.msra.mxu0 0.0
        %1291 = vmatprep.subr.mxu0 0.0
        %1292 = vmatpush1.msra.mxu0 0.0
        %1293 = vmatprep.subr.mxu0 0.0
        %1294 = vmatpush1.msra.mxu0 0.0
        %1295 = vmatprep.subr.mxu0 0.0
        %1296 = vmatpush1.msra.mxu0 0.0
        %1297 = vmatprep.subr.mxu0 0.0
        %1298 = vmatpush1.msra.mxu0 0.0
        %1299 = vmatprep.subr.mxu0 0.0
        %1300 = vmatpush1.msra.mxu0 0.0
        %1301 = vmatprep.subr.mxu0 0.0
        %1302 = vmatpush1.msra.mxu0 0.0
        %1303 = vmatprep.subr.mxu0 0.0
        %1304 = vmatpush1.msra.mxu0 0.0
        %1305 = vmatprep.subr.mxu0 0.0
        %1306 = vmatpush1.msra.mxu0 0.0
        %1307 = vmatprep.subr.mxu0 0.0
        %1308 = vmatpush1.msra.mxu0 0.0
        %1309 = vmatprep.subr.mxu0 0.0
        %1310 = vmatpush1.msra.mxu0 0.0
        %1311 = vmatprep.mubr.f32.mxu0 0.0
        %1312 = vmatmul.mubr.f32.gmra.mrb[0].mxu0 %v1245
        %v1313 = vpop.f32.mrb[0].mxu0
        %v1314 = vadd.f32 0.0, %v1313
        %v1315 = vpop.f32.mrb[0].mxu0
        %1316 = vdwg.mxu0
        %v1318 = vrot.slane %v1314, 2
        %v1319 = vrot.slane %v1314, 3
        %v1322 = vadd.f32 %v340, %v1318
        %v1323 = vadd.f32 %v345, %v1319
        %v1324 = vxor.u32 %v1322, 2147483648
        %v1325 = vxor.u32 %v1323, 2147483648
        %v1326 = vmul.f32 %v1324, 1.442695
        %v1327 = vpow.pop %v1326
        %v1328 = vmul.f32 %v1325, 1.442695
        %v1329 = vpow.pop %v1328
        %v1330 = vadd.f32 %v1327, 1.0
        %v1331 = vadd.f32 %v1329, 1.0
        %v1332 = vrcp.pop %v1330
        %v1333 = vmul.f32 1.0, %v1332
        %v1334 = vrcp.pop %v1331
        %v1335 = vmul.f32 1.0, %v1334
        %v1336 = vtanh.pop %v1322
        %v1337 = vtanh.pop %v1323
        %v1340 = vrot.slane %v1215, 7
        %v1341 = vrot.slane %v1216, 7
        %v1344 = vmul.f32 %v1333, %v1340
        %v1345 = vmul.f32 %v1335, %v1341
        %1348 = vrot.lane.b32.xlu0 %v1336, 64
        %v1349 = vpop.permute.xlu0 %1348
        %1350 = vrot.lane.b32.xlu0 %v1337, 64
        %v1351 = vpop.permute.xlu0 %1350
        %v1354 = vmul.f32 %v1333, %v1349
        %v1355 = vmul.f32 %v1335, %v1351
        %1358 = vrot.lane.b32.xlu0 %v1354, 32
        %v1359 = vpop.permute.xlu0 %1358
        %1360 = vrot.lane.b32.xlu0 %v1355, 32
        %v1361 = vpop.permute.xlu0 %1360
        %v1364 = vadd.f32 %v1344, %v1359
        %v1365 = vadd.f32 %v1345, %v1361
        %v1366 = vtanh.pop %v1364
        %v1367 = vtanh.pop %v1365
        %1370 = vrot.lane.b32.xlu0 %v1366, 64
        %v1371 = vpop.permute.xlu0 %1370
        %1372 = vrot.lane.b32.xlu0 %v1367, 64
        %v1373 = vpop.permute.xlu0 %1372
        %v1376 = vmul.f32 %v1333, %v1371
        %v1377 = vmul.f32 %v1335, %v1373
        %1380 = vrot.lane.b32.xlu0 %v1376, 32
        %v1381 = vpop.permute.xlu0 %1380
        %1382 = vrot.lane.b32.xlu0 %v1377, 32
        %v1383 = vpop.permute.xlu0 %1382
        %vm1386 = vcmask 260102
        %1387 = vst.msk [vmem:[%s243] sm:$0x40] %vm1386, %v1381
        %1388 = vst.msk [vmem:[%s243 + $0x8] sm:$0x40] %vm1386, %v1383
        %v1389 = vrot.slane %v1376, 6
        %v1390 = vrot.slane %v1377, 5
        %v1391 = vsel %vm498, %v1390, %v1389
        %1392 = vrot.lane.b32.xlu0 %v1391, 32
        %v1393 = vpop.permute.xlu0 %1392
        %v1394 = vsel %vm350, %v1393, 0
        %1396 = vmatprep.subr.mxu0 0.0
        %1397 = vmatpush1.msra.mxu0 %v253
        %1398 = vmatprep.subr.mxu0 0.0
        %1399 = vmatpush1.msra.mxu0 %v254
        %1400 = vmatprep.subr.mxu0 0.0
        %1401 = vmatpush1.msra.mxu0 %v255
        %1402 = vmatprep.subr.mxu0 0.0
        %1403 = vmatpush1.msra.mxu0 %v256
        %1404 = vmatprep.subr.mxu0 0.0
        %1405 = vmatpush1.msra.mxu0 0.0
        %1406 = vmatprep.subr.mxu0 0.0
        %1407 = vmatpush1.msra.mxu0 0.0
        %1408 = vmatprep.subr.mxu0 0.0
        %1409 = vmatpush1.msra.mxu0 0.0
        %1410 = vmatprep.subr.mxu0 0.0
        %1411 = vmatpush1.msra.mxu0 0.0
        %1412 = vmatprep.subr.mxu0 0.0
        %1413 = vmatpush1.msra.mxu0 0.0
        %1414 = vmatprep.subr.mxu0 0.0
        %1415 = vmatpush1.msra.mxu0 0.0
        %1416 = vmatprep.subr.mxu0 0.0
        %1417 = vmatpush1.msra.mxu0 0.0
        %1418 = vmatprep.subr.mxu0 0.0
        %1419 = vmatpush1.msra.mxu0 0.0
        %1420 = vmatprep.subr.mxu0 0.0
        %1421 = vmatpush1.msra.mxu0 0.0
        %1422 = vmatprep.subr.mxu0 0.0
        %1423 = vmatpush1.msra.mxu0 0.0
        %1424 = vmatprep.subr.mxu0 0.0
        %1425 = vmatpush1.msra.mxu0 0.0
        %1426 = vmatprep.subr.mxu0 0.0
        %1427 = vmatpush1.msra.mxu0 0.0
        %1428 = vmatprep.subr.mxu0 0.0
        %1429 = vmatpush1.msra.mxu0 0.0
        %1430 = vmatprep.subr.mxu0 0.0
        %1431 = vmatpush1.msra.mxu0 0.0
        %1432 = vmatprep.subr.mxu0 0.0
        %1433 = vmatpush1.msra.mxu0 0.0
        %1434 = vmatprep.subr.mxu0 0.0
        %1435 = vmatpush1.msra.mxu0 0.0
        %1436 = vmatprep.subr.mxu0 0.0
        %1437 = vmatpush1.msra.mxu0 0.0
        %1438 = vmatprep.subr.mxu0 0.0
        %1439 = vmatpush1.msra.mxu0 0.0
        %1440 = vmatprep.subr.mxu0 0.0
        %1441 = vmatpush1.msra.mxu0 0.0
        %1442 = vmatprep.subr.mxu0 0.0
        %1443 = vmatpush1.msra.mxu0 0.0
        %1444 = vmatprep.subr.mxu0 0.0
        %1445 = vmatpush1.msra.mxu0 0.0
        %1446 = vmatprep.subr.mxu0 0.0
        %1447 = vmatpush1.msra.mxu0 0.0
        %1448 = vmatprep.subr.mxu0 0.0
        %1449 = vmatpush1.msra.mxu0 0.0
        %1450 = vmatprep.subr.mxu0 0.0
        %1451 = vmatpush1.msra.mxu0 0.0
        %1452 = vmatprep.subr.mxu0 0.0
        %1453 = vmatpush1.msra.mxu0 0.0
        %1454 = vmatprep.subr.mxu0 0.0
        %1455 = vmatpush1.msra.mxu0 0.0
        %1456 = vmatprep.subr.mxu0 0.0
        %1457 = vmatpush1.msra.mxu0 0.0
        %1458 = vmatprep.subr.mxu0 0.0
        %1459 = vmatpush1.msra.mxu0 0.0
        %1460 = vmatprep.mubr.f32.mxu0 0.0
        %1461 = vmatmul.mubr.f32.gmra.mrb[0].mxu0 %v1394
        %v1462 = vpop.f32.mrb[0].mxu0
        %v1463 = vadd.f32 0.0, %v1462
        %v1464 = vpop.f32.mrb[0].mxu0
        %1465 = vdwg.mxu0
        %v1467 = vrot.slane %v1463, 1
        %v1468 = vrot.slane %v1463, 2
        %v1471 = vadd.f32 %v340, %v1467
        %v1472 = vadd.f32 %v345, %v1468
        %v1473 = vxor.u32 %v1471, 2147483648
        %v1474 = vxor.u32 %v1472, 2147483648
        %v1475 = vmul.f32 %v1473, 1.442695
        %v1476 = vpow.pop %v1475
        %v1477 = vmul.f32 %v1474, 1.442695
        %v1478 = vpow.pop %v1477
        %v1479 = vadd.f32 %v1476, 1.0
        %v1480 = vadd.f32 %v1478, 1.0
        %v1481 = vrcp.pop %v1479
        %v1482 = vmul.f32 1.0, %v1481
        %v1483 = vrcp.pop %v1480
        %v1484 = vmul.f32 1.0, %v1483
        %v1485 = vtanh.pop %v1471
        %v1486 = vtanh.pop %v1472
        %v1489 = vrot.slane %v1364, 7
        %v1490 = vrot.slane %v1365, 7
        %v1493 = vmul.f32 %v1482, %v1489
        %v1494 = vmul.f32 %v1484, %v1490
        %1497 = vrot.lane.b32.xlu0 %v1485, 64
        %v1498 = vpop.permute.xlu0 %1497
        %1499 = vrot.lane.b32.xlu0 %v1486, 64
        %v1500 = vpop.permute.xlu0 %1499
        %v1503 = vmul.f32 %v1482, %v1498
        %v1504 = vmul.f32 %v1484, %v1500
        %1507 = vrot.lane.b32.xlu0 %v1503, 32
        %v1508 = vpop.permute.xlu0 %1507
        %1509 = vrot.lane.b32.xlu0 %v1504, 32
        %v1510 = vpop.permute.xlu0 %1509
        %v1513 = vadd.f32 %v1493, %v1508
        %v1514 = vadd.f32 %v1494, %v1510
        %v1515 = vtanh.pop %v1513
        %v1516 = vtanh.pop %v1514
        %1519 = vrot.lane.b32.xlu0 %v1515, 64
        %v1520 = vpop.permute.xlu0 %1519
        %1521 = vrot.lane.b32.xlu0 %v1516, 64
        %v1522 = vpop.permute.xlu0 %1521
        %v1525 = vmul.f32 %v1482, %v1520
        %v1526 = vmul.f32 %v1484, %v1522
        %1529 = vrot.lane.b32.xlu0 %v1525, 32
        %v1530 = vpop.permute.xlu0 %1529
        %1531 = vrot.lane.b32.xlu0 %v1526, 32
        %v1532 = vpop.permute.xlu0 %1531
        %vm1535 = vcmask 261127
        %1536 = vst.msk [vmem:[%s243] sm:$0x80] %vm1535, %v1530
        %1537 = vst.msk [vmem:[%s243 + $0x8] sm:$0x80] %vm1535, %v1532
        %v1538 = vrot.slane %v1526, 7
        %1539 = vrot.lane.b32.xlu0 %v1538, 32
        %v1540 = vpop.permute.xlu0 %1539
        %1542 = vst.msk [vmem:[#allocation2 - $0x7] sm:$0x80] %vm1535, %v1530
        %1543 = vst.msk [vmem:[#allocation2 + $0x1] sm:$0x1] %vm494, %v1540
        %v1546 = vrot.slane %v1514, 7
        %1547 = vrot.lane.b32.xlu0 %v1513, 96
        %v1548 = vpop.permute.xlu0 %1547
        %1549 = vrot.lane.b32.xlu0 %v1546, 96
        %v1550 = vpop.permute.xlu0 %1549
        %1553 = vst.msk [vmem:[#allocation3 - $0x7] sm:$0x80] %vm1535, %v1548
        %1554 = vst.msk [vmem:[#allocation3 + $0x1] sm:$0x1] %vm494, %v1550
        %s1555 = sand.u32 %s119, 1
        %s1556 = scalar_lea.sflag [#allocation6], %s1555
        %s1557 = sand.u32 %s119, 1
        %s1558 = smul.addr %s1557, 16
        %s1559 = scalar_lea.vmem [#allocation10], %s1558
        // Predicated region
        $region53: #{tpu_custom_call.1} parent=35 // pred_check
          %p1560 = pneg %p129
        $region54: #{tpu_custom_call.1} parent=35 // pred_check_branch
          %1562 = sbr.rel (%p1560) target = $region56
        $region55: #{tpu_custom_call.1} parent=35 // pred_region
          %s1564 = ssub.s32 256, 256
          %1565 = vsyncadd %s1556, %s1564
          %s1566 = smul.addr %s22, 128
          %s1567 = scalar_lea.hbm %s4, %s1566
          %s1568 = sshll.u32 %s1559, 4
          %s1569 = int_to_ptr.vmem [resolvable:$true] %s1568
          %1574 = dma.vmem_to_hbm [thread:$0]  %s1569, 256, %s1567, %s1556, 128, 256, 8
        $region56: #{tpu_custom_call.1} parent=35 // pred_fallthru
          _
      $region36: #{tpu_custom_call.1} parent=5 // pred_fallthru
        _
      %p1575 = scmp.le.s32.totalorder 2, %s17
      // Predicated region
      $region57: #{tpu_custom_call.1} parent=5 // pred_check
        %p1576 = pneg %p1575
      $region58: #{tpu_custom_call.1} parent=5 // pred_check_branch
        %1578 = sbr.rel (%p1576) target = $region60
      $region59: #{tpu_custom_call.1} parent=5 // pred_region
        %s1579 = ssub.s32 %s17, 2
        // Predicated region
        $region61: #{tpu_custom_call.1} parent=59 // pred_check
          %p1580 = pneg %p135
        $region62: #{tpu_custom_call.1} parent=59 // pred_check_branch
          %1582 = sbr.rel (%p1580) target = $region64
        $region63: #{tpu_custom_call.1} parent=59 // pred_region
          %s1583 = sand.u32 %s120, 1
          %s1584 = scalar_lea.sflag [#allocation6], %s1583
          %s1585 = sand.u32 %s120, 1
          %s1586 = smul.addr %s1585, 16
          %s1587 = scalar_lea.vmem [#allocation10], %s1586
          %1588 = dma.done %s1584, 256
        $region64: #{tpu_custom_call.1} parent=59 // pred_fallthru
          _
      $region60: #{tpu_custom_call.1} parent=5 // pred_fallthru
        _
    $region6: #{tpu_custom_call.1} parent=1 // loop_footer
      %s21 = sadd.s32 1, %s17
    $region7: #{tpu_custom_call.1} parent=1 // loop_footer_branch
      %16 = sbr.rel target = $region3
    $region8: #{tpu_custom_call.1} parent=1 // loop_exit
      _
    %1589 = vsyncpa [#allocation5], 1
    %s1590 = scalar_lea.sflag [#allocation5], 1
    %1591 = vsyncpa %s1590, 1
    %1592 = vsyncpa [#allocation8], 1
    %1593 = vsyncpa [#allocation6], 1
    %s1594 = scalar_lea.sflag [#allocation6], 1
    %1595 = vsyncpa %s1594, 1

</llo_original>
